<compile_context>
chip_gen: v6e
topology: v6e:2x2x1
jax: 0.10.0
libtpu: 0.0.40
codegen_flags: <defaults>
</compile_context>

<pallas_src>
import jax
import jax.numpy as jnp
from jax.experimental import pallas as pl
from jax.experimental.pallas import tpu as pltpu


def _round_up(n, m):
    return (n + m - 1) // m * m


# ----------------------------------------------------------------------------
# Fused kernel: one-hot embedding gather + MLP (Linear->ReLU->Linear->ReLU->Linear)
# ----------------------------------------------------------------------------
def _make_kernel(n_features, embed_dims):
    def kernel(ids_ref, *refs):
        tables = refs[:n_features]
        w1_ref, b1_ref, w2_ref, b2_ref, w3_ref, b3_ref, o_ref = refs[n_features:]

        ids = ids_ref[...]                      # [TB, n_features] int32
        tb = ids.shape[0]
        h1_dim = w1_ref.shape[1]

        # h1 = concat_f(e_f) @ W1 + b1  ==  sum_f (e_f @ W1[rows_f]) + b1
        h1 = jnp.zeros((tb, h1_dim), jnp.float32)
        row = 0
        for f in range(n_features):
            tbl = tables[f][...]                # [V_pad, E] bf16 (VMEM-resident)
            v_pad = tbl.shape[0]
            e_dim = embed_dims[f]
            ids_col = ids[:, f:f + 1]           # [TB, 1]
            iota = jax.lax.broadcasted_iota(jnp.int32, (tb, v_pad), 1)
            one_hot = jnp.where(ids_col == iota, 1.0, 0.0).astype(tbl.dtype)
            # embedding gather on the MXU, f32 accumulate (exact for one-hot)
            emb_f = jnp.dot(one_hot, tbl, preferred_element_type=jnp.float32)
            w1_slice = w1_ref[row:row + e_dim, :]                 # [E, H1p] bf16
            h1 = h1 + jnp.dot(emb_f.astype(w1_slice.dtype), w1_slice,
                              preferred_element_type=jnp.float32)
            row += e_dim

        h1 = jnp.maximum(h1 + b1_ref[...], 0.0)                   # f32 bias+ReLU

        h2 = jnp.dot(h1.astype(w2_ref.dtype), w2_ref[...],
                     preferred_element_type=jnp.float32)
        h2 = jnp.maximum(h2 + b2_ref[...], 0.0)

        out = jnp.dot(h2.astype(w3_ref.dtype), w3_ref[...],
                      preferred_element_type=jnp.float32)
        out = out + b3_ref[...]                                   # point_output

        o_ref[...] = out.astype(o_ref.dtype)                      # lane-dense store

    return kernel


# ----------------------------------------------------------------------------
# Wrapper: batch-tiled pallas_call with resident weights/tables
# ----------------------------------------------------------------------------
def emb_cls_forward(x, kernel_tables, kernel_mlp, embed_dims, n_classes,
                    tile_b=128):
    """x: int32 [B, n_features] category ids.  Returns [B] (n_classes==1) or
    [B, n_classes]."""
    B, n_features = x.shape
    w1, b1, w2, b2, w3, b3 = kernel_mlp
    nc_pad = w3.shape[1]

    # Pad batch to a multiple of the row tile (padded rows use id 0; sliced off).
    num_tiles = pl.cdiv(B, tile_b)
    b_pad = num_tiles * tile_b
    x_pad = jnp.zeros((b_pad, n_features), jnp.int32).at[:B].set(
        x.astype(jnp.int32))

    resident = lambda shape: pl.BlockSpec(shape, lambda i: (0, 0))

    in_specs = [pl.BlockSpec((tile_b, n_features), lambda i: (i, 0))]
    in_specs += [resident(t.shape) for t in kernel_tables]
    in_specs += [resident(w1.shape), resident(b1.shape),
                 resident(w2.shape), resident(b2.shape),
                 resident(w3.shape), resident(b3.shape)]
    out_spec = pl.BlockSpec((tile_b, nc_pad), lambda i: (i, 0))

    out = pl.pallas_call(
        _make_kernel(n_features, embed_dims),
        out_shape=jax.ShapeDtypeStruct((b_pad, nc_pad), jnp.float32),
        grid=(num_tiles,),
        in_specs=in_specs,
        out_specs=out_spec,
        compiler_params=pltpu.CompilerParams(
            # batch axis is embarrassingly parallel -> megacore split on v7x
            dimension_semantics=("parallel",),
            # usage here is well under a MiB; explicit limit keeps tile sizing
            # honest for v7x's 64 MiB VMEM (budget 2 bufs x TB x 128 x 4B +
            # resident bf16 weights when scaling TB up).
            vmem_limit_bytes=32 * 1024 * 1024,
        ),
    )(x_pad, *kernel_tables, w1, b1, w2, b2, w3, b3)

    p = out[:B, :n_classes]
    if n_classes == 1:
        p = jnp.squeeze(p, axis=1)              # PyTorch p.squeeze(1) semantics
    return p


# ----------------------------------------------------------------------------
# Parameter construction (PyTorch-like init) + kernel-layout preparation
# ----------------------------------------------------------------------------
def make_params(key, vocab_sizes, embed_dims, hidden_dims, n_classes):
    keys = jax.random.split(key, 16)
    ki = iter(keys)

    emb_tables = [
        jax.random.normal(next(ki), (v, d), dtype=jnp.float32)
        for v, d in zip(vocab_sizes, embed_dims)
    ]

    dims = [sum(embed_dims)] + list(hidden_dims) + [n_classes]

    def linear(kin, fan_in, fan_out):
        bound = 1.0 / jnp.sqrt(fan_in)
        kw, kb = jax.random.split(kin)
        w = jax.random.uniform(kw, (fan_in, fan_out), jnp.float32, -bound, bound)
        b = jax.random.uniform(kb, (1, fan_out), jnp.float32, -bound, bound)
        return w, b

    w1, b1 = linear(next(ki), dims[0], dims[1])
    w2, b2 = linear(next(ki), dims[1], dims[2])
    w3, b3 = linear(next(ki), dims[2], dims[3])
    return emb_tables, (w1, b1, w2, b2, w3, b3)


def prepare_kernel_params(emb_tables, mlp_params, lane=128, sublane=8):
    """Zero-pad to TPU-friendly shapes, cast matmul operands to bf16."""
    def pad2(a, rows, cols):
        return jnp.zeros((rows, cols), a.dtype).at[:a.shape[0], :a.shape[1]].set(a)

    tables = []
    for t in emb_tables:
        v, e = t.shape
        tables.append(pad2(t, _round_up(v, sublane), e).astype(jnp.bfloat16))

    w1, b1, w2, b2, w3, b3 = mlp_params
    d_in, h1 = w1.shape
    h2 = w2.shape[1]
    nc = w3.shape[1]
    h1p, h2p, ncp = _round_up(h1, lane), _round_up(h2, lane), _round_up(nc, lane)

    w1p = pad2(w1, d_in, h1p).astype(jnp.bfloat16)
    b1p = pad2(b1, 1, h1p)                               # biases stay f32
    w2p = pad2(w2, h1p, h2p).astype(jnp.bfloat16)
    b2p = pad2(b2, 1, h2p)
    w3p = pad2(w3, h2p, ncp).astype(jnp.bfloat16)
    b3p = pad2(b3, 1, ncp)
    return tables, (w1p, b1p, w2p, b2p, w3p, b3p)


# ----------------------------------------------------------------------------
# Pure-JAX reference mirroring the kernel's bf16-in / f32-accumulate numerics
# ----------------------------------------------------------------------------
def ref_forward(x, kernel_tables, kernel_mlp, n_classes):
    f32 = lambda a: a.astype(jnp.float32)
    rb = lambda a: a.astype(jnp.bfloat16).astype(jnp.float32)

    emb = jnp.concatenate(
        [f32(t)[x[:, i]] for i, t in enumerate(kernel_tables)], axis=-1)
    w1, b1, w2, b2, w3, b3 = kernel_mlp
    h1 = jnp.maximum(emb @ f32(w1) + b1, 0.0)
    h2 = jnp.maximum(rb(h1) @ f32(w2) + b2, 0.0)
    p = rb(h2) @ f32(w3) + b3
    p = p[:, :n_classes]
    if n_classes == 1:
        p = jnp.squeeze(p, axis=1)
    return p


if __name__ == "__main__":
    # Synthetic config: 3 sparse features (embed_dim 16 each -> n_dims=48),
    # MLP hidden dims (64, 32), point_output with n_classes=1, batch=8.
    # TODO(synk): only sparse categorical features are implemented (no dense /
    # sequence feature branches of EmbeddingLayer; MLP dropout is identity).
    vocab_sizes = (100, 50, 80)
    embed_dims = (16, 16, 16)
    hidden_dims = (64, 32)
    n_classes = 1
    B = 8

    key = jax.random.PRNGKey(0)
    kparam, kx = jax.random.split(key)
    emb_tables, mlp_params = make_params(
        kparam, vocab_sizes, embed_dims, hidden_dims, n_classes)
    kernel_tables, kernel_mlp = prepare_kernel_params(emb_tables, mlp_params)

    x_cols = [
        jax.random.randint(jax.random.fold_in(kx, i), (B, 1), 0, v,
                           dtype=jnp.int32)
        for i, v in enumerate(vocab_sizes)
    ]
    x = jnp.concatenate(x_cols, axis=1)

    out = emb_cls_forward(x, kernel_tables, kernel_mlp, embed_dims, n_classes,
                          tile_b=128)
    out = jax.block_until_ready(out)

    ref = ref_forward(x, kernel_tables, kernel_mlp, n_classes)
    assert out.shape == (B,), out.shape
    assert jnp.allclose(out, ref, atol=1e-3, rtol=1e-3), (out, ref)

    print("KERNEL_OK")
</pallas_src>

<mosaic_0001>
module attributes {stable_mosaic.version = 11 : i64} {
  func.func @kernel(%arg0: i32, %arg1: memref<128x3xi32, #tpu.memory_space<vmem>>, %arg2: memref<104x16xbf16, #tpu.memory_space<vmem>>, %arg3: memref<56x16xbf16, #tpu.memory_space<vmem>>, %arg4: memref<80x16xbf16, #tpu.memory_space<vmem>>, %arg5: memref<48x128xbf16, #tpu.memory_space<vmem>>, %arg6: memref<1x128xf32, #tpu.memory_space<vmem>>, %arg7: memref<128x128xbf16, #tpu.memory_space<vmem>>, %arg8: memref<1x128xf32, #tpu.memory_space<vmem>>, %arg9: memref<128x128xbf16, #tpu.memory_space<vmem>>, %arg10: memref<1x128xf32, #tpu.memory_space<vmem>>, %arg11: memref<128x128xf32, #tpu.memory_space<vmem>>) attributes {dimension_semantics = [#tpu.dimension_semantics<parallel>], iteration_bounds = array<i64: 1>, scalar_prefetch = 0 : i64, scratch_operands = 0 : i64, tpu.core_type = #tpu.core_type<tc>, window_params = [{transform_indices = @transform_0, window_bounds = array<i64: 128, 3>}, {pipeline_mode = #tpu.pipeline_mode<synchronous>, transform_indices = @transform_1, window_bounds = array<i64: 104, 16>}, {pipeline_mode = #tpu.pipeline_mode<synchronous>, transform_indices = @transform_2, window_bounds = array<i64: 56, 16>}, {pipeline_mode = #tpu.pipeline_mode<synchronous>, transform_indices = @transform_3, window_bounds = array<i64: 80, 16>}, {pipeline_mode = #tpu.pipeline_mode<synchronous>, transform_indices = @transform_4, window_bounds = array<i64: 48, 128>}, {pipeline_mode = #tpu.pipeline_mode<synchronous>, transform_indices = @transform_5, window_bounds = array<i64: 1, 128>}, {pipeline_mode = #tpu.pipeline_mode<synchronous>, transform_indices = @transform_6, window_bounds = array<i64: 128, 128>}, {pipeline_mode = #tpu.pipeline_mode<synchronous>, transform_indices = @transform_7, window_bounds = array<i64: 1, 128>}, {pipeline_mode = #tpu.pipeline_mode<synchronous>, transform_indices = @transform_8, window_bounds = array<i64: 128, 128>}, {pipeline_mode = #tpu.pipeline_mode<synchronous>, transform_indices = @transform_9, window_bounds = array<i64: 1, 128>}, {transform_indices = @transform_10, window_bounds = array<i64: 128, 128>}]} {
    %c0 = arith.constant 0 : index
    %c0_0 = arith.constant 0 : index
    %0 = vector.load %arg1[%c0, %c0_0] : memref<128x3xi32, #tpu.memory_space<vmem>>, vector<128x3xi32>
    %cst = arith.constant 0.000000e+00 : f32
    %1 = vector.broadcast %cst : f32 to vector<128x128xf32>
    %c0_1 = arith.constant 0 : index
    %c0_2 = arith.constant 0 : index
    %2 = vector.load %arg2[%c0_1, %c0_2] : memref<104x16xbf16, #tpu.memory_space<vmem>>, vector<104x16xbf16>
    %3 = vector.extract_strided_slice %0 {offsets = [0, 0], sizes = [128, 1], strides = [1, 1]} : vector<128x3xi32> to vector<128x1xi32>
    %4 = tpu.iota {dimensions = array<i32: 1>} : vector<128x104xi32>
    %5 = vector.broadcast %3 : vector<128x1xi32> to vector<128x104xi32>
    %6 = arith.cmpi eq, %5, %4 : vector<128x104xi32>
    %cst_3 = arith.constant 1.000000e+00 : f32
    %cst_4 = arith.constant 0.000000e+00 : f32
    %7 = vector.broadcast %cst_3 : f32 to vector<128x104xf32>
    %8 = vector.broadcast %cst_4 : f32 to vector<128x104xf32>
    %9 = arith.select %6, %7, %8 : vector<128x104xi1>, vector<128x104xf32>
    %10 = arith.truncf %9 : vector<128x104xf32> to vector<128x104xbf16>
    %cst_5 = arith.constant dense<0.000000e+00> : vector<128x16xf32>
    %11 = tpu.matmul %10, %2, %cst_5 {dimension_numbers = #tpu.dot_dimension_numbers<[1], [0], [0], [1], [0, 0, 1, 1], [], []>} : vector<128x104xbf16>, vector<104x16xbf16>, vector<128x16xf32> -> vector<128x16xf32>
    %c0_6 = arith.constant 0 : index
    %c0_7 = arith.constant 0 : index
    %12 = vector.load %arg5[%c0_6, %c0_7] : memref<48x128xbf16, #tpu.memory_space<vmem>>, vector<16x128xbf16>
    %13 = arith.truncf %11 : vector<128x16xf32> to vector<128x16xbf16>
    %cst_8 = arith.constant dense<0.000000e+00> : vector<128x128xf32>
    %14 = tpu.matmul %13, %12, %cst_8 {dimension_numbers = #tpu.dot_dimension_numbers<[1], [0], [0], [1], [0, 0, 1, 1], [], []>} : vector<128x16xbf16>, vector<16x128xbf16>, vector<128x128xf32> -> vector<128x128xf32>
    %15 = arith.addf %1, %14 : vector<128x128xf32>
    %c0_9 = arith.constant 0 : index
    %c0_10 = arith.constant 0 : index
    %16 = vector.load %arg3[%c0_9, %c0_10] : memref<56x16xbf16, #tpu.memory_space<vmem>>, vector<56x16xbf16>
    %17 = vector.extract_strided_slice %0 {offsets = [0, 1], sizes = [128, 1], strides = [1, 1]} : vector<128x3xi32> to vector<128x1xi32>
    %18 = tpu.iota {dimensions = array<i32: 1>} : vector<128x56xi32>
    %19 = vector.broadcast %17 : vector<128x1xi32> to vector<128x56xi32>
    %20 = arith.cmpi eq, %19, %18 : vector<128x56xi32>
    %cst_11 = arith.constant 1.000000e+00 : f32
    %cst_12 = arith.constant 0.000000e+00 : f32
    %21 = vector.broadcast %cst_11 : f32 to vector<128x56xf32>
    %22 = vector.broadcast %cst_12 : f32 to vector<128x56xf32>
    %23 = arith.select %20, %21, %22 : vector<128x56xi1>, vector<128x56xf32>
    %24 = arith.truncf %23 : vector<128x56xf32> to vector<128x56xbf16>
    %cst_13 = arith.constant dense<0.000000e+00> : vector<128x16xf32>
    %25 = tpu.matmul %24, %16, %cst_13 {dimension_numbers = #tpu.dot_dimension_numbers<[1], [0], [0], [1], [0, 0, 1, 1], [], []>} : vector<128x56xbf16>, vector<56x16xbf16>, vector<128x16xf32> -> vector<128x16xf32>
    %c16 = arith.constant 16 : index
    %c0_14 = arith.constant 0 : index
    %26 = vector.load %arg5[%c16, %c0_14] : memref<48x128xbf16, #tpu.memory_space<vmem>>, vector<16x128xbf16>
    %27 = arith.truncf %25 : vector<128x16xf32> to vector<128x16xbf16>
    %cst_15 = arith.constant dense<0.000000e+00> : vector<128x128xf32>
    %28 = tpu.matmul %27, %26, %cst_15 {dimension_numbers = #tpu.dot_dimension_numbers<[1], [0], [0], [1], [0, 0, 1, 1], [], []>} : vector<128x16xbf16>, vector<16x128xbf16>, vector<128x128xf32> -> vector<128x128xf32>
    %29 = arith.addf %15, %28 : vector<128x128xf32>
    %c0_16 = arith.constant 0 : index
    %c0_17 = arith.constant 0 : index
    %30 = vector.load %arg4[%c0_16, %c0_17] : memref<80x16xbf16, #tpu.memory_space<vmem>>, vector<80x16xbf16>
    %31 = vector.extract_strided_slice %0 {offsets = [0, 2], sizes = [128, 1], strides = [1, 1]} : vector<128x3xi32> to vector<128x1xi32>
    %32 = tpu.iota {dimensions = array<i32: 1>} : vector<128x80xi32>
    %33 = vector.broadcast %31 : vector<128x1xi32> to vector<128x80xi32>
    %34 = arith.cmpi eq, %33, %32 : vector<128x80xi32>
    %cst_18 = arith.constant 1.000000e+00 : f32
    %cst_19 = arith.constant 0.000000e+00 : f32
    %35 = vector.broadcast %cst_18 : f32 to vector<128x80xf32>
    %36 = vector.broadcast %cst_19 : f32 to vector<128x80xf32>
    %37 = arith.select %34, %35, %36 : vector<128x80xi1>, vector<128x80xf32>
    %38 = arith.truncf %37 : vector<128x80xf32> to vector<128x80xbf16>
    %cst_20 = arith.constant dense<0.000000e+00> : vector<128x16xf32>
    %39 = tpu.matmul %38, %30, %cst_20 {dimension_numbers = #tpu.dot_dimension_numbers<[1], [0], [0], [1], [0, 0, 1, 1], [], []>} : vector<128x80xbf16>, vector<80x16xbf16>, vector<128x16xf32> -> vector<128x16xf32>
    %c32 = arith.constant 32 : index
    %c0_21 = arith.constant 0 : index
    %40 = vector.load %arg5[%c32, %c0_21] : memref<48x128xbf16, #tpu.memory_space<vmem>>, vector<16x128xbf16>
    %41 = arith.truncf %39 : vector<128x16xf32> to vector<128x16xbf16>
    %cst_22 = arith.constant dense<0.000000e+00> : vector<128x128xf32>
    %42 = tpu.matmul %41, %40, %cst_22 {dimension_numbers = #tpu.dot_dimension_numbers<[1], [0], [0], [1], [0, 0, 1, 1], [], []>} : vector<128x16xbf16>, vector<16x128xbf16>, vector<128x128xf32> -> vector<128x128xf32>
    %43 = arith.addf %29, %42 : vector<128x128xf32>
    %c0_23 = arith.constant 0 : index
    %c0_24 = arith.constant 0 : index
    %44 = vector.load %arg6[%c0_23, %c0_24] : memref<1x128xf32, #tpu.memory_space<vmem>>, vector<1x128xf32>
    %45 = vector.broadcast %44 : vector<1x128xf32> to vector<128x128xf32>
    %46 = arith.addf %43, %45 : vector<128x128xf32>
    %cst_25 = arith.constant 0.000000e+00 : f32
    %47 = vector.broadcast %cst_25 : f32 to vector<128x128xf32>
    %48 = arith.maximumf %46, %47 : vector<128x128xf32>
    %49 = arith.truncf %48 : vector<128x128xf32> to vector<128x128xbf16>
    %c0_26 = arith.constant 0 : index
    %c0_27 = arith.constant 0 : index
    %50 = vector.load %arg7[%c0_26, %c0_27] : memref<128x128xbf16, #tpu.memory_space<vmem>>, vector<128x128xbf16>
    %cst_28 = arith.constant dense<0.000000e+00> : vector<128x128xf32>
    %51 = tpu.matmul %49, %50, %cst_28 {dimension_numbers = #tpu.dot_dimension_numbers<[1], [0], [0], [1], [0, 0, 1, 1], [], []>} : vector<128x128xbf16>, vector<128x128xbf16>, vector<128x128xf32> -> vector<128x128xf32>
    %c0_29 = arith.constant 0 : index
    %c0_30 = arith.constant 0 : index
    %52 = vector.load %arg8[%c0_29, %c0_30] : memref<1x128xf32, #tpu.memory_space<vmem>>, vector<1x128xf32>
    %53 = vector.broadcast %52 : vector<1x128xf32> to vector<128x128xf32>
    %54 = arith.addf %51, %53 : vector<128x128xf32>
    %cst_31 = arith.constant 0.000000e+00 : f32
    %55 = vector.broadcast %cst_31 : f32 to vector<128x128xf32>
    %56 = arith.maximumf %54, %55 : vector<128x128xf32>
    %57 = arith.truncf %56 : vector<128x128xf32> to vector<128x128xbf16>
    %c0_32 = arith.constant 0 : index
    %c0_33 = arith.constant 0 : index
    %58 = vector.load %arg9[%c0_32, %c0_33] : memref<128x128xbf16, #tpu.memory_space<vmem>>, vector<128x128xbf16>
    %cst_34 = arith.constant dense<0.000000e+00> : vector<128x128xf32>
    %59 = tpu.matmul %57, %58, %cst_34 {dimension_numbers = #tpu.dot_dimension_numbers<[1], [0], [0], [1], [0, 0, 1, 1], [], []>} : vector<128x128xbf16>, vector<128x128xbf16>, vector<128x128xf32> -> vector<128x128xf32>
    %c0_35 = arith.constant 0 : index
    %c0_36 = arith.constant 0 : index
    %60 = vector.load %arg10[%c0_35, %c0_36] : memref<1x128xf32, #tpu.memory_space<vmem>>, vector<1x128xf32>
    %61 = vector.broadcast %60 : vector<1x128xf32> to vector<128x128xf32>
    %62 = arith.addf %59, %61 : vector<128x128xf32>
    %c0_37 = arith.constant 0 : index
    %c0_38 = arith.constant 0 : index
    %63 = vector.load %arg11[%c0_37, %c0_38] : memref<128x128xf32, #tpu.memory_space<vmem>>, vector<128x128xf32>
    tpu.vector_store %arg11[%c0_37, %c0_38], %62 {strides = array<i32>} : memref<128x128xf32, #tpu.memory_space<vmem>>, vector<128x128xf32>,
    return
  }
  func.func @transform_0(%arg0: i32) -> (i32, i32) {
    %c0_i32 = arith.constant 0 : i32
    %c0_i32_0 = arith.constant 0 : i32
    return %arg0, %c0_i32 : i32, i32
  }
  func.func @transform_1(%arg0: i32) -> (i32, i32) {
    %c0_i32 = arith.constant 0 : i32
    %c0_i32_0 = arith.constant 0 : i32
    %c0_i32_1 = arith.constant 0 : i32
    return %c0_i32, %c0_i32_0 : i32, i32
  }
  func.func @transform_2(%arg0: i32) -> (i32, i32) {
    %c0_i32 = arith.constant 0 : i32
    %c0_i32_0 = arith.constant 0 : i32
    %c0_i32_1 = arith.constant 0 : i32
    return %c0_i32, %c0_i32_0 : i32, i32
  }
  func.func @transform_3(%arg0: i32) -> (i32, i32) {
    %c0_i32 = arith.constant 0 : i32
    %c0_i32_0 = arith.constant 0 : i32
    %c0_i32_1 = arith.constant 0 : i32
    return %c0_i32, %c0_i32_0 : i32, i32
  }
  func.func @transform_4(%arg0: i32) -> (i32, i32) {
    %c0_i32 = arith.constant 0 : i32
    %c0_i32_0 = arith.constant 0 : i32
    %c0_i32_1 = arith.constant 0 : i32
    return %c0_i32, %c0_i32_0 : i32, i32
  }
  func.func @transform_5(%arg0: i32) -> (i32, i32) {
    %c0_i32 = arith.constant 0 : i32
    %c0_i32_0 = arith.constant 0 : i32
    %c0_i32_1 = arith.constant 0 : i32
    return %c0_i32, %c0_i32_0 : i32, i32
  }
  func.func @transform_6(%arg0: i32) -> (i32, i32) {
    %c0_i32 = arith.constant 0 : i32
    %c0_i32_0 = arith.constant 0 : i32
    %c0_i32_1 = arith.constant 0 : i32
    return %c0_i32, %c0_i32_0 : i32, i32
  }
  func.func @transform_7(%arg0: i32) -> (i32, i32) {
    %c0_i32 = arith.constant 0 : i32
    %c0_i32_0 = arith.constant 0 : i32
    %c0_i32_1 = arith.constant 0 : i32
    return %c0_i32, %c0_i32_0 : i32, i32
  }
  func.func @transform_8(%arg0: i32) -> (i32, i32) {
    %c0_i32 = arith.constant 0 : i32
    %c0_i32_0 = arith.constant 0 : i32
    %c0_i32_1 = arith.constant 0 : i32
    return %c0_i32, %c0_i32_0 : i32, i32
  }
  func.func @transform_9(%arg0: i32) -> (i32, i32) {
    %c0_i32 = arith.constant 0 : i32
    %c0_i32_0 = arith.constant 0 : i32
    %c0_i32_1 = arith.constant 0 : i32
    return %c0_i32, %c0_i32_0 : i32, i32
  }
  func.func @transform_10(%arg0: i32) -> (i32, i32) {
    %c0_i32 = arith.constant 0 : i32
    %c0_i32_0 = arith.constant 0 : i32
    return %arg0, %c0_i32 : i32, i32
  }
}

</mosaic_0001>

<llo_original>
// kernel: tpu_custom_call.1
$region0: #{tpu_custom_call.1}
  #allocation0 [shape = 'u32[]', space=smem, size = 0x4, offset = 0x4, fixed_abs, tag = 'smem constant byte address 0x4 - core index']
  #allocation1 [shape = 'u32[144,128]{1,0:T(1,128)}', space=vmem, size = 0x12000, scoped, tag = 'internal scratch']
  %s0 = inlined_call_operand.vmem [shape: s32[128,3], index: 0, kind: input, shape index: {}]
  %s1 = inlined_call_operand.vmem [shape: bf16[104,16], index: 1, kind: input, shape index: {}]
  %s2 = inlined_call_operand.vmem [shape: bf16[56,16], index: 2, kind: input, shape index: {}]
  %s3 = inlined_call_operand.vmem [shape: bf16[80,16], index: 3, kind: input, shape index: {}]
  %s4 = inlined_call_operand.vmem [shape: bf16[48,128], index: 4, kind: input, shape index: {}]
  %s5 = inlined_call_operand.vmem [shape: f32[1,128], index: 5, kind: input, shape index: {}]
  %s6 = inlined_call_operand.vmem [shape: bf16[128,128], index: 6, kind: input, shape index: {}]
  %s7 = inlined_call_operand.vmem [shape: f32[1,128], index: 7, kind: input, shape index: {}]
  %s8 = inlined_call_operand.vmem [shape: bf16[128,128], index: 8, kind: input, shape index: {}]
  %s9 = inlined_call_operand.vmem [shape: f32[1,128], index: 9, kind: input, shape index: {}]
  %s10 = inlined_call_operand.hbm [shape: f32[128,128], index: 10, kind: output, shape index: {}]
  %s11 = sld [smem:[#allocation0]]
  $region50: #{tpu_custom_call.1} parent=0
    _
  %s13 = ssub.s32 1, %s11
  %s14 = scalar_select 0, %s13, %s11
  $region1: #{tpu_custom_call.1} parent=0
    #allocation2 [shape = 'u8[65536]{0}', space=vmem, size = 0x10000, scoped, tag = 'output window, operand 0, single buffered']
    #allocation3 [shape = 's32[1]{0}', space=sflag, size = 0x4, scoped, tag = 'scoped memory for tpu_custom_call.1']
    %15 = vsyncpa [#allocation3], 0
    // Predicated region
    $region2: #{tpu_custom_call.1} parent=1 // pred_check
      _
    $region3: #{tpu_custom_call.1} parent=1 // pred_check_branch
      %17 = sbr.rel (0) target = $region5
    $region4: #{tpu_custom_call.1} parent=1 // pred_region
      _
    $region5: #{tpu_custom_call.1} parent=1 // pred_fallthru
      _
    // Predicated region
    $region6: #{tpu_custom_call.1} parent=1 // pred_check
      _
    $region7: #{tpu_custom_call.1} parent=1 // pred_check_branch
      %19 = sbr.rel (0) target = $region9
    $region8: #{tpu_custom_call.1} parent=1 // pred_region
      _
    $region9: #{tpu_custom_call.1} parent=1 // pred_fallthru
      _
    // Predicated region
    $region10: #{tpu_custom_call.1} parent=1 // pred_check
      _
    $region11: #{tpu_custom_call.1} parent=1 // pred_check_branch
      %21 = sbr.rel (0) target = $region13
    $region12: #{tpu_custom_call.1} parent=1 // pred_region
      _
    $region13: #{tpu_custom_call.1} parent=1 // pred_fallthru
      _
    // Predicated region
    $region14: #{tpu_custom_call.1} parent=1 // pred_check
      _
    $region15: #{tpu_custom_call.1} parent=1 // pred_check_branch
      %23 = sbr.rel (0) target = $region17
    $region16: #{tpu_custom_call.1} parent=1 // pred_region
      _
    $region17: #{tpu_custom_call.1} parent=1 // pred_fallthru
      _
    // Predicated region
    $region18: #{tpu_custom_call.1} parent=1 // pred_check
      _
    $region19: #{tpu_custom_call.1} parent=1 // pred_check_branch
      %25 = sbr.rel (0) target = $region21
    $region20: #{tpu_custom_call.1} parent=1 // pred_region
      _
    $region21: #{tpu_custom_call.1} parent=1 // pred_fallthru
      _
    // Predicated region
    $region22: #{tpu_custom_call.1} parent=1 // pred_check
      _
    $region23: #{tpu_custom_call.1} parent=1 // pred_check_branch
      %27 = sbr.rel (0) target = $region25
    $region24: #{tpu_custom_call.1} parent=1 // pred_region
      _
    $region25: #{tpu_custom_call.1} parent=1 // pred_fallthru
      _
    // Predicated region
    $region26: #{tpu_custom_call.1} parent=1 // pred_check
      _
    $region27: #{tpu_custom_call.1} parent=1 // pred_check_branch
      %29 = sbr.rel (0) target = $region29
    $region28: #{tpu_custom_call.1} parent=1 // pred_region
      _
    $region29: #{tpu_custom_call.1} parent=1 // pred_fallthru
      _
    // Predicated region
    $region30: #{tpu_custom_call.1} parent=1 // pred_check
      _
    $region31: #{tpu_custom_call.1} parent=1 // pred_check_branch
      %31 = sbr.rel (0) target = $region33
    $region32: #{tpu_custom_call.1} parent=1 // pred_region
      _
    $region33: #{tpu_custom_call.1} parent=1 // pred_fallthru
      _
    // Predicated region
    $region34: #{tpu_custom_call.1} parent=1 // pred_check
      _
    $region35: #{tpu_custom_call.1} parent=1 // pred_check_branch
      %33 = sbr.rel (0) target = $region37
    $region36: #{tpu_custom_call.1} parent=1 // pred_region
      _
    $region37: #{tpu_custom_call.1} parent=1 // pred_fallthru
      _
    // Predicated region
    $region38: #{tpu_custom_call.1} parent=1 // pred_check
      _
    $region39: #{tpu_custom_call.1} parent=1 // pred_check_branch
      %35 = sbr.rel (0) target = $region41
    $region40: #{tpu_custom_call.1} parent=1 // pred_region
      _
    $region41: #{tpu_custom_call.1} parent=1 // pred_fallthru
      _
    %v37 = vld [vmem:[%s0] sm:$0xff]
    %v38 = vld [vmem:[%s0 + $0x8] sm:$0xff]
    %v39 = vld [vmem:[%s0 + $0x10] sm:$0xff]
    %v40 = vld [vmem:[%s0 + $0x18] sm:$0xff]
    %v41 = vld [vmem:[%s0 + $0x20] sm:$0xff]
    %v42 = vld [vmem:[%s0 + $0x28] sm:$0xff]
    %v43 = vld [vmem:[%s0 + $0x30] sm:$0xff]
    %v44 = vld [vmem:[%s0 + $0x38] sm:$0xff]
    %v45 = vld [vmem:[%s0 + $0x40] sm:$0xff]
    %v46 = vld [vmem:[%s0 + $0x48] sm:$0xff]
    %v47 = vld [vmem:[%s0 + $0x50] sm:$0xff]
    %v48 = vld [vmem:[%s0 + $0x58] sm:$0xff]
    %v49 = vld [vmem:[%s0 + $0x60] sm:$0xff]
    %v50 = vld [vmem:[%s0 + $0x68] sm:$0xff]
    %v51 = vld [vmem:[%s0 + $0x70] sm:$0xff]
    %v52 = vld [vmem:[%s0 + $0x78] sm:$0xff]
    %v53 = vld [vmem:[%s1] sm:$0xf]
    %v54 = vld [vmem:[%s1 + $0x4] sm:$0xf]
    %v55 = vld [vmem:[%s1 + $0x8] sm:$0xf]
    %v56 = vld [vmem:[%s1 + $0xc] sm:$0xf]
    %v57 = vld [vmem:[%s1 + $0x10] sm:$0xf]
    %v58 = vld [vmem:[%s1 + $0x14] sm:$0xf]
    %v59 = vld [vmem:[%s1 + $0x18] sm:$0xf]
    %v60 = vld [vmem:[%s1 + $0x1c] sm:$0xf]
    %v61 = vld [vmem:[%s1 + $0x20] sm:$0xf]
    %v62 = vld [vmem:[%s1 + $0x24] sm:$0xf]
    %v63 = vld [vmem:[%s1 + $0x28] sm:$0xf]
    %v64 = vld [vmem:[%s1 + $0x2c] sm:$0xf]
    %v65 = vld [vmem:[%s1 + $0x30] sm:$0xf]
    %v66 = vlaneseq
    %v67 = vand.u32 %v66, 127
    %68 = vset.pattern.permute.xlu0 0
    %69 = vperm.xlu0 %68, %v37
    %v70 = vpop.permute.xlu0 %69
    %71 = vset.pattern.permute.xlu0 0
    %72 = vperm.xlu0 %71, %v38
    %v73 = vpop.permute.xlu0 %72
    %74 = vset.pattern.permute.xlu0 0
    %75 = vperm.xlu0 %74, %v39
    %v76 = vpop.permute.xlu0 %75
    %77 = vset.pattern.permute.xlu0 0
    %78 = vperm.xlu0 %77, %v40
    %v79 = vpop.permute.xlu0 %78
    %80 = vset.pattern.permute.xlu0 0
    %81 = vperm.xlu0 %80, %v41
    %v82 = vpop.permute.xlu0 %81
    %83 = vset.pattern.permute.xlu0 0
    %84 = vperm.xlu0 %83, %v42
    %v85 = vpop.permute.xlu0 %84
    %86 = vset.pattern.permute.xlu0 0
    %87 = vperm.xlu0 %86, %v43
    %v88 = vpop.permute.xlu0 %87
    %89 = vset.pattern.permute.xlu0 0
    %90 = vperm.xlu0 %89, %v44
    %v91 = vpop.permute.xlu0 %90
    %92 = vset.pattern.permute.xlu0 0
    %93 = vperm.xlu0 %92, %v45
    %v94 = vpop.permute.xlu0 %93
    %95 = vset.pattern.permute.xlu0 0
    %96 = vperm.xlu0 %95, %v46
    %v97 = vpop.permute.xlu0 %96
    %98 = vset.pattern.permute.xlu0 0
    %99 = vperm.xlu0 %98, %v47
    %v100 = vpop.permute.xlu0 %99
    %101 = vset.pattern.permute.xlu0 0
    %102 = vperm.xlu0 %101, %v48
    %v103 = vpop.permute.xlu0 %102
    %104 = vset.pattern.permute.xlu0 0
    %105 = vperm.xlu0 %104, %v49
    %v106 = vpop.permute.xlu0 %105
    %107 = vset.pattern.permute.xlu0 0
    %108 = vperm.xlu0 %107, %v50
    %v109 = vpop.permute.xlu0 %108
    %110 = vset.pattern.permute.xlu0 0
    %111 = vperm.xlu0 %110, %v51
    %v112 = vpop.permute.xlu0 %111
    %113 = vset.pattern.permute.xlu0 0
    %114 = vperm.xlu0 %113, %v52
    %v115 = vpop.permute.xlu0 %114
    %vm116 = vcmp.eq.s32.totalorder %v70, %v67
    %vm117 = vcmp.eq.s32.totalorder %v73, %v67
    %vm118 = vcmp.eq.s32.totalorder %v76, %v67
    %vm119 = vcmp.eq.s32.totalorder %v79, %v67
    %vm120 = vcmp.eq.s32.totalorder %v82, %v67
    %vm121 = vcmp.eq.s32.totalorder %v85, %v67
    %vm122 = vcmp.eq.s32.totalorder %v88, %v67
    %vm123 = vcmp.eq.s32.totalorder %v91, %v67
    %vm124 = vcmp.eq.s32.totalorder %v94, %v67
    %vm125 = vcmp.eq.s32.totalorder %v97, %v67
    %vm126 = vcmp.eq.s32.totalorder %v100, %v67
    %vm127 = vcmp.eq.s32.totalorder %v103, %v67
    %vm128 = vcmp.eq.s32.totalorder %v106, %v67
    %vm129 = vcmp.eq.s32.totalorder %v109, %v67
    %vm130 = vcmp.eq.s32.totalorder %v112, %v67
    %vm131 = vcmp.eq.s32.totalorder %v115, %v67
    %v132 = vsel %vm116, 1.0, 0.0
    %v133 = vsel %vm117, 1.0, 0.0
    %v134 = vsel %vm118, 1.0, 0.0
    %v135 = vsel %vm119, 1.0, 0.0
    %v136 = vsel %vm120, 1.0, 0.0
    %v137 = vsel %vm121, 1.0, 0.0
    %v138 = vsel %vm122, 1.0, 0.0
    %v139 = vsel %vm123, 1.0, 0.0
    %v140 = vsel %vm124, 1.0, 0.0
    %v141 = vsel %vm125, 1.0, 0.0
    %v142 = vsel %vm126, 1.0, 0.0
    %v143 = vsel %vm127, 1.0, 0.0
    %v144 = vsel %vm128, 1.0, 0.0
    %v145 = vsel %vm129, 1.0, 0.0
    %v146 = vsel %vm130, 1.0, 0.0
    %v147 = vsel %vm131, 1.0, 0.0
    %v148 = vpack.c.bf16 %v133, %v132
    %v149 = vpack.c.bf16 %v135, %v134
    %v150 = vpack.c.bf16 %v137, %v136
    %v151 = vpack.c.bf16 %v139, %v138
    %v152 = vpack.c.bf16 %v141, %v140
    %v153 = vpack.c.bf16 %v143, %v142
    %v154 = vpack.c.bf16 %v145, %v144
    %v155 = vpack.c.bf16 %v147, %v146
    %v169 = vunpack.c.l.b16 %v53
    %v170 = vunpack.c.l.b16 %v54
    %v171 = vunpack.c.l.b16 %v55
    %v172 = vunpack.c.l.b16 %v56
    %v173 = vunpack.c.l.b16 %v57
    %v174 = vunpack.c.l.b16 %v58
    %v175 = vunpack.c.l.b16 %v59
    %v176 = vunpack.c.l.b16 %v60
    %v177 = vunpack.c.l.b16 %v61
    %v178 = vunpack.c.l.b16 %v62
    %v179 = vunpack.c.l.b16 %v63
    %v180 = vunpack.c.l.b16 %v64
    %v181 = vunpack.c.l.b16 %v65
    %v182 = vpack.c.b16 %v170, %v169
    %v183 = vpack.c.b16 %v172, %v171
    %v184 = vpack.c.b16 %v174, %v173
    %v185 = vpack.c.b16 %v176, %v175
    %v186 = vpack.c.b16 %v178, %v177
    %v187 = vpack.c.b16 %v180, %v179
    %v188 = vpack.c.b16 %v181, %v181
    %vm195 = vcmask 850944
    %v197 = vsel %vm195, %v148, 0
    %v200 = vsel %vm195, %v149, 0
    %v203 = vsel %vm195, %v150, 0
    %v206 = vsel %vm195, %v151, 0
    %v209 = vsel %vm195, %v152, 0
    %v212 = vsel %vm195, %v153, 0
    %v215 = vsel %vm195, %v154, 0
    %v218 = vsel %vm195, %v155, 0
    %vm220 = vcmask 1043456
    %v222 = vsel %vm220, %v188, 0
    %224 = vmatprep.subr.bf16.mxu0 0
    %225 = vmatpush1.bf16.msra.mxu0 0
    %226 = vmatprep.subr.bf16.mxu0 0
    %227 = vmatpush1.bf16.msra.mxu0 %v222
    %228 = vmatprep.subr.bf16.mxu0 0
    %229 = vmatpush1.bf16.msra.mxu0 %v187
    %230 = vmatprep.subr.bf16.mxu0 0
    %231 = vmatpush1.bf16.msra.mxu0 %v186
    %232 = vmatprep.subr.bf16.mxu0 0
    %233 = vmatpush1.bf16.msra.mxu0 %v185
    %234 = vmatprep.subr.bf16.mxu0 0
    %235 = vmatpush1.bf16.msra.mxu0 %v184
    %236 = vmatprep.subr.bf16.mxu0 0
    %237 = vmatpush1.bf16.msra.mxu0 %v183
    %238 = vmatprep.subr.bf16.mxu0 0
    %239 = vmatpush1.bf16.msra.mxu0 %v182
    %240 = vmatprep.subr.bf16.mxu0 0
    %241 = vmatpush2.bf16.msra.mxu0 0
    %242 = vmatprep.subr.bf16.mxu0 0
    %243 = vmatpush2.bf16.msra.mxu0 0
    %244 = vmatprep.subr.bf16.mxu0 0
    %245 = vmatpush2.bf16.msra.mxu0 0
    %246 = vmatprep.subr.bf16.mxu0 0
    %247 = vmatpush2.bf16.msra.mxu0 0
    %248 = vmatprep.subr.bf16.mxu0 0
    %249 = vmatpush2.bf16.msra.mxu0 0
    %250 = vmatprep.subr.bf16.mxu0 0
    %251 = vmatpush2.bf16.msra.mxu0 0
    %252 = vmatprep.subr.bf16.mxu0 0
    %253 = vmatpush2.bf16.msra.mxu0 0
    %254 = vmatprep.subr.bf16.mxu0 0
    %255 = vmatpush2.bf16.msra.mxu0 0
    %256 = vmatprep.mubr.bf16.mxu0 0
    %257 = vmatmul.mubr.bf16.gmra.mxu0 %v197
    %v258 = vpop.f32.mrf.mxu0
    %v259 = vadd.f32 0.0, %v258
    %v260 = vpop.f32.mrf.mxu0
    %v261 = vpop.f32.mrf.mxu0
    %v262 = vadd.f32 0.0, %v261
    %v263 = vpop.f32.mrf.mxu0
    %264 = vmatprep.mubr.bf16.mxu0 0
    %265 = vmatmul.mubr.bf16.gmra.mxu0 %v200
    %v266 = vpop.f32.mrf.mxu0
    %v267 = vadd.f32 0.0, %v266
    %v268 = vpop.f32.mrf.mxu0
    %v269 = vpop.f32.mrf.mxu0
    %v270 = vadd.f32 0.0, %v269
    %v271 = vpop.f32.mrf.mxu0
    %272 = vmatprep.mubr.bf16.mxu0 0
    %273 = vmatmul.mubr.bf16.gmra.mxu0 %v203
    %v274 = vpop.f32.mrf.mxu0
    %v275 = vadd.f32 0.0, %v274
    %v276 = vpop.f32.mrf.mxu0
    %v277 = vpop.f32.mrf.mxu0
    %v278 = vadd.f32 0.0, %v277
    %v279 = vpop.f32.mrf.mxu0
    %280 = vmatprep.mubr.bf16.mxu0 0
    %281 = vmatmul.mubr.bf16.gmra.mxu0 %v206
    %v282 = vpop.f32.mrf.mxu0
    %v283 = vadd.f32 0.0, %v282
    %v284 = vpop.f32.mrf.mxu0
    %v285 = vpop.f32.mrf.mxu0
    %v286 = vadd.f32 0.0, %v285
    %v287 = vpop.f32.mrf.mxu0
    %288 = vmatprep.mubr.bf16.mxu0 0
    %289 = vmatmul.mubr.bf16.gmra.mxu0 %v209
    %v290 = vpop.f32.mrf.mxu0
    %v291 = vadd.f32 0.0, %v290
    %v292 = vpop.f32.mrf.mxu0
    %v293 = vpop.f32.mrf.mxu0
    %v294 = vadd.f32 0.0, %v293
    %v295 = vpop.f32.mrf.mxu0
    %296 = vmatprep.mubr.bf16.mxu0 0
    %297 = vmatmul.mubr.bf16.gmra.mxu0 %v212
    %v298 = vpop.f32.mrf.mxu0
    %v299 = vadd.f32 0.0, %v298
    %v300 = vpop.f32.mrf.mxu0
    %v301 = vpop.f32.mrf.mxu0
    %v302 = vadd.f32 0.0, %v301
    %v303 = vpop.f32.mrf.mxu0
    %304 = vmatprep.mubr.bf16.mxu0 0
    %305 = vmatmul.mubr.bf16.gmra.mxu0 %v215
    %v306 = vpop.f32.mrf.mxu0
    %v307 = vadd.f32 0.0, %v306
    %v308 = vpop.f32.mrf.mxu0
    %v309 = vpop.f32.mrf.mxu0
    %v310 = vadd.f32 0.0, %v309
    %v311 = vpop.f32.mrf.mxu0
    %312 = vmatprep.mubr.bf16.mxu0 0
    %313 = vmatmul.mubr.bf16.gmra.mxu0 %v218
    %v314 = vpop.f32.mrf.mxu0
    %v315 = vadd.f32 0.0, %v314
    %v316 = vpop.f32.mrf.mxu0
    %v317 = vpop.f32.mrf.mxu0
    %v318 = vadd.f32 0.0, %v317
    %v319 = vpop.f32.mrf.mxu0
    %320 = vdwg.mxu0
    %v321 = vld [vmem:[%s4] sm:$0xf]
    %v322 = vld [vmem:[%s4 + $0x4] sm:$0xf]
    %v323 = vpack.c.bf16 %v262, %v259
    %v324 = vpack.c.bf16 %v270, %v267
    %v325 = vpack.c.bf16 %v278, %v275
    %v326 = vpack.c.bf16 %v286, %v283
    %v327 = vpack.c.bf16 %v294, %v291
    %v328 = vpack.c.bf16 %v302, %v299
    %v329 = vpack.c.bf16 %v310, %v307
    %v330 = vpack.c.bf16 %v318, %v315
    %v331 = vld [vmem:[%s2] sm:$0xf]
    %v332 = vld [vmem:[%s2 + $0x4] sm:$0xf]
    %v333 = vld [vmem:[%s2 + $0x8] sm:$0xf]
    %v334 = vld [vmem:[%s2 + $0xc] sm:$0xf]
    %v335 = vld [vmem:[%s2 + $0x10] sm:$0xf]
    %v336 = vld [vmem:[%s2 + $0x14] sm:$0xf]
    %v337 = vld [vmem:[%s2 + $0x18] sm:$0xf]
    %338 = vset.pattern.permute.xlu0 1
    %339 = vperm.xlu0 %338, %v37
    %v340 = vpop.permute.xlu0 %339
    %341 = vset.pattern.permute.xlu0 1
    %342 = vperm.xlu0 %341, %v38
    %v343 = vpop.permute.xlu0 %342
    %344 = vset.pattern.permute.xlu0 1
    %345 = vperm.xlu0 %344, %v39
    %v346 = vpop.permute.xlu0 %345
    %347 = vset.pattern.permute.xlu0 1
    %348 = vperm.xlu0 %347, %v40
    %v349 = vpop.permute.xlu0 %348
    %350 = vset.pattern.permute.xlu0 1
    %351 = vperm.xlu0 %350, %v41
    %v352 = vpop.permute.xlu0 %351
    %353 = vset.pattern.permute.xlu0 1
    %354 = vperm.xlu0 %353, %v42
    %v355 = vpop.permute.xlu0 %354
    %356 = vset.pattern.permute.xlu0 1
    %357 = vperm.xlu0 %356, %v43
    %v358 = vpop.permute.xlu0 %357
    %359 = vset.pattern.permute.xlu0 1
    %360 = vperm.xlu0 %359, %v44
    %v361 = vpop.permute.xlu0 %360
    %362 = vset.pattern.permute.xlu0 1
    %363 = vperm.xlu0 %362, %v45
    %v364 = vpop.permute.xlu0 %363
    %365 = vset.pattern.permute.xlu0 1
    %366 = vperm.xlu0 %365, %v46
    %v367 = vpop.permute.xlu0 %366
    %368 = vset.pattern.permute.xlu0 1
    %369 = vperm.xlu0 %368, %v47
    %v370 = vpop.permute.xlu0 %369
    %371 = vset.pattern.permute.xlu0 1
    %372 = vperm.xlu0 %371, %v48
    %v373 = vpop.permute.xlu0 %372
    %374 = vset.pattern.permute.xlu0 1
    %375 = vperm.xlu0 %374, %v49
    %v376 = vpop.permute.xlu0 %375
    %377 = vset.pattern.permute.xlu0 1
    %378 = vperm.xlu0 %377, %v50
    %v379 = vpop.permute.xlu0 %378
    %380 = vset.pattern.permute.xlu0 1
    %381 = vperm.xlu0 %380, %v51
    %v382 = vpop.permute.xlu0 %381
    %383 = vset.pattern.permute.xlu0 1
    %384 = vperm.xlu0 %383, %v52
    %v385 = vpop.permute.xlu0 %384
    %vm386 = vcmp.eq.s32.totalorder %v340, %v67
    %vm387 = vcmp.eq.s32.totalorder %v343, %v67
    %vm388 = vcmp.eq.s32.totalorder %v346, %v67
    %vm389 = vcmp.eq.s32.totalorder %v349, %v67
    %vm390 = vcmp.eq.s32.totalorder %v352, %v67
    %vm391 = vcmp.eq.s32.totalorder %v355, %v67
    %vm392 = vcmp.eq.s32.totalorder %v358, %v67
    %vm393 = vcmp.eq.s32.totalorder %v361, %v67
    %vm394 = vcmp.eq.s32.totalorder %v364, %v67
    %vm395 = vcmp.eq.s32.totalorder %v367, %v67
    %vm396 = vcmp.eq.s32.totalorder %v370, %v67
    %vm397 = vcmp.eq.s32.totalorder %v373, %v67
    %vm398 = vcmp.eq.s32.totalorder %v376, %v67
    %vm399 = vcmp.eq.s32.totalorder %v379, %v67
    %vm400 = vcmp.eq.s32.totalorder %v382, %v67
    %vm401 = vcmp.eq.s32.totalorder %v385, %v67
    %v402 = vsel %vm386, 1.0, 0.0
    %v403 = vsel %vm387, 1.0, 0.0
    %v404 = vsel %vm388, 1.0, 0.0
    %v405 = vsel %vm389, 1.0, 0.0
    %v406 = vsel %vm390, 1.0, 0.0
    %v407 = vsel %vm391, 1.0, 0.0
    %v408 = vsel %vm392, 1.0, 0.0
    %v409 = vsel %vm393, 1.0, 0.0
    %v410 = vsel %vm394, 1.0, 0.0
    %v411 = vsel %vm395, 1.0, 0.0
    %v412 = vsel %vm396, 1.0, 0.0
    %v413 = vsel %vm397, 1.0, 0.0
    %v414 = vsel %vm398, 1.0, 0.0
    %v415 = vsel %vm399, 1.0, 0.0
    %v416 = vsel %vm400, 1.0, 0.0
    %v417 = vsel %vm401, 1.0, 0.0
    %v418 = vpack.c.bf16 %v403, %v402
    %v419 = vpack.c.bf16 %v405, %v404
    %v420 = vpack.c.bf16 %v407, %v406
    %v421 = vpack.c.bf16 %v409, %v408
    %v422 = vpack.c.bf16 %v411, %v410
    %v423 = vpack.c.bf16 %v413, %v412
    %v424 = vpack.c.bf16 %v415, %v414
    %v425 = vpack.c.bf16 %v417, %v416
    %v433 = vunpack.c.l.b16 %v331
    %v434 = vunpack.c.l.b16 %v332
    %v435 = vunpack.c.l.b16 %v333
    %v436 = vunpack.c.l.b16 %v334
    %v437 = vunpack.c.l.b16 %v335
    %v438 = vunpack.c.l.b16 %v336
    %v439 = vunpack.c.l.b16 %v337
    %v440 = vpack.c.b16 %v434, %v433
    %v441 = vpack.c.b16 %v436, %v435
    %v442 = vpack.c.b16 %v438, %v437
    %v443 = vpack.c.b16 %v439, %v439
    %vm447 = vcmask 457728
    %v449 = vsel %vm447, %v418, 0
    %v452 = vsel %vm447, %v419, 0
    %v455 = vsel %vm447, %v420, 0
    %v458 = vsel %vm447, %v421, 0
    %v461 = vsel %vm447, %v422, 0
    %v464 = vsel %vm447, %v423, 0
    %v467 = vsel %vm447, %v424, 0
    %v470 = vsel %vm447, %v425, 0
    %v473 = vsel %vm220, %v443, 0
    %475 = vmatprep.subr.bf16.mxu0 0
    %476 = vmatpush1.bf16.msra.mxu0 0
    %477 = vmatprep.subr.bf16.mxu0 0
    %478 = vmatpush1.bf16.msra.mxu0 0
    %479 = vmatprep.subr.bf16.mxu0 0
    %480 = vmatpush1.bf16.msra.mxu0 0
    %481 = vmatprep.subr.bf16.mxu0 0
    %482 = vmatpush1.bf16.msra.mxu0 0
    %483 = vmatprep.subr.bf16.mxu0 0
    %484 = vmatpush1.bf16.msra.mxu0 %v473
    %485 = vmatprep.subr.bf16.mxu0 0
    %486 = vmatpush1.bf16.msra.mxu0 %v442
    %487 = vmatprep.subr.bf16.mxu0 0
    %488 = vmatpush1.bf16.msra.mxu0 %v441
    %489 = vmatprep.subr.bf16.mxu0 0
    %490 = vmatpush1.bf16.msra.mxu0 %v440
    %491 = vmatprep.subr.bf16.mxu0 0
    %492 = vmatpush2.bf16.msra.mxu0 0
    %493 = vmatprep.subr.bf16.mxu0 0
    %494 = vmatpush2.bf16.msra.mxu0 0
    %495 = vmatprep.subr.bf16.mxu0 0
    %496 = vmatpush2.bf16.msra.mxu0 0
    %497 = vmatprep.subr.bf16.mxu0 0
    %498 = vmatpush2.bf16.msra.mxu0 0
    %499 = vmatprep.subr.bf16.mxu0 0
    %500 = vmatpush2.bf16.msra.mxu0 0
    %501 = vmatprep.subr.bf16.mxu0 0
    %502 = vmatpush2.bf16.msra.mxu0 0
    %503 = vmatprep.subr.bf16.mxu0 0
    %504 = vmatpush2.bf16.msra.mxu0 0
    %505 = vmatprep.subr.bf16.mxu0 0
    %506 = vmatpush2.bf16.msra.mxu0 0
    %507 = vmatprep.mubr.bf16.mxu0 0
    %508 = vmatmul.mubr.bf16.gmra.mxu0 %v449
    %v509 = vpop.f32.mrf.mxu0
    %v510 = vadd.f32 0.0, %v509
    %v511 = vpop.f32.mrf.mxu0
    %v512 = vpop.f32.mrf.mxu0
    %v513 = vadd.f32 0.0, %v512
    %v514 = vpop.f32.mrf.mxu0
    %515 = vmatprep.mubr.bf16.mxu0 0
    %516 = vmatmul.mubr.bf16.gmra.mxu0 %v452
    %v517 = vpop.f32.mrf.mxu0
    %v518 = vadd.f32 0.0, %v517
    %v519 = vpop.f32.mrf.mxu0
    %v520 = vpop.f32.mrf.mxu0
    %v521 = vadd.f32 0.0, %v520
    %v522 = vpop.f32.mrf.mxu0
    %523 = vmatprep.mubr.bf16.mxu0 0
    %524 = vmatmul.mubr.bf16.gmra.mxu0 %v455
    %v525 = vpop.f32.mrf.mxu0
    %v526 = vadd.f32 0.0, %v525
    %v527 = vpop.f32.mrf.mxu0
    %v528 = vpop.f32.mrf.mxu0
    %v529 = vadd.f32 0.0, %v528
    %v530 = vpop.f32.mrf.mxu0
    %531 = vmatprep.mubr.bf16.mxu0 0
    %532 = vmatmul.mubr.bf16.gmra.mxu0 %v458
    %v533 = vpop.f32.mrf.mxu0
    %v534 = vadd.f32 0.0, %v533
    %v535 = vpop.f32.mrf.mxu0
    %v536 = vpop.f32.mrf.mxu0
    %v537 = vadd.f32 0.0, %v536
    %v538 = vpop.f32.mrf.mxu0
    %539 = vmatprep.mubr.bf16.mxu0 0
    %540 = vmatmul.mubr.bf16.gmra.mxu0 %v461
    %v541 = vpop.f32.mrf.mxu0
    %v542 = vadd.f32 0.0, %v541
    %v543 = vpop.f32.mrf.mxu0
    %v544 = vpop.f32.mrf.mxu0
    %v545 = vadd.f32 0.0, %v544
    %v546 = vpop.f32.mrf.mxu0
    %547 = vmatprep.mubr.bf16.mxu0 0
    %548 = vmatmul.mubr.bf16.gmra.mxu0 %v464
    %v549 = vpop.f32.mrf.mxu0
    %v550 = vadd.f32 0.0, %v549
    %v551 = vpop.f32.mrf.mxu0
    %v552 = vpop.f32.mrf.mxu0
    %v553 = vadd.f32 0.0, %v552
    %v554 = vpop.f32.mrf.mxu0
    %555 = vmatprep.mubr.bf16.mxu0 0
    %556 = vmatmul.mubr.bf16.gmra.mxu0 %v467
    %v557 = vpop.f32.mrf.mxu0
    %v558 = vadd.f32 0.0, %v557
    %v559 = vpop.f32.mrf.mxu0
    %v560 = vpop.f32.mrf.mxu0
    %v561 = vadd.f32 0.0, %v560
    %v562 = vpop.f32.mrf.mxu0
    %563 = vmatprep.mubr.bf16.mxu0 0
    %564 = vmatmul.mubr.bf16.gmra.mxu0 %v470
    %v565 = vpop.f32.mrf.mxu0
    %v566 = vadd.f32 0.0, %v565
    %v567 = vpop.f32.mrf.mxu0
    %v568 = vpop.f32.mrf.mxu0
    %v569 = vadd.f32 0.0, %v568
    %v570 = vpop.f32.mrf.mxu0
    %571 = vdwg.mxu0
    %v572 = vld [vmem:[%s4 + $0x8] sm:$0xf]
    %v573 = vld [vmem:[%s4 + $0xc] sm:$0xf]
    %v574 = vpack.c.bf16 %v513, %v510
    %v575 = vpack.c.bf16 %v521, %v518
    %v576 = vpack.c.bf16 %v529, %v526
    %v577 = vpack.c.bf16 %v537, %v534
    %v578 = vpack.c.bf16 %v545, %v542
    %v579 = vpack.c.bf16 %v553, %v550
    %v580 = vpack.c.bf16 %v561, %v558
    %v581 = vpack.c.bf16 %v569, %v566
    %v584 = vunpack.c.l.b16 %v572
    %v585 = vunpack.c.l.b16 %v573
    %v586 = vpack.c.b16 %v585, %v584
    %vm588 = vcmask 130048
    %v590 = vsel %vm588, %v574, 0
    %v593 = vsel %vm588, %v575, 0
    %v596 = vsel %vm588, %v576, 0
    %v599 = vsel %vm588, %v577, 0
    %v602 = vsel %vm588, %v578, 0
    %v605 = vsel %vm588, %v579, 0
    %v608 = vsel %vm588, %v580, 0
    %v611 = vsel %vm588, %v581, 0
    %613 = vmatprep.subr.bf16.mxu0 0
    %614 = vmatpush1.bf16.msra.mxu0 0
    %615 = vmatprep.subr.bf16.mxu0 0
    %616 = vmatpush1.bf16.msra.mxu0 0
    %617 = vmatprep.subr.bf16.mxu0 0
    %618 = vmatpush1.bf16.msra.mxu0 0
    %619 = vmatprep.subr.bf16.mxu0 0
    %620 = vmatpush1.bf16.msra.mxu0 0
    %621 = vmatprep.subr.bf16.mxu0 0
    %622 = vmatpush1.bf16.msra.mxu0 0
    %623 = vmatprep.subr.bf16.mxu0 0
    %624 = vmatpush1.bf16.msra.mxu0 0
    %625 = vmatprep.subr.bf16.mxu0 0
    %626 = vmatpush1.bf16.msra.mxu0 0
    %627 = vmatprep.subr.bf16.mxu0 0
    %628 = vmatpush1.bf16.msra.mxu0 %v586
    %629 = vmatprep.subr.bf16.mxu0 0
    %630 = vmatpush2.bf16.msra.mxu0 0
    %631 = vmatprep.subr.bf16.mxu0 0
    %632 = vmatpush2.bf16.msra.mxu0 0
    %633 = vmatprep.subr.bf16.mxu0 0
    %634 = vmatpush2.bf16.msra.mxu0 0
    %635 = vmatprep.subr.bf16.mxu0 0
    %636 = vmatpush2.bf16.msra.mxu0 0
    %637 = vmatprep.subr.bf16.mxu0 0
    %638 = vmatpush2.bf16.msra.mxu0 0
    %639 = vmatprep.subr.bf16.mxu0 0
    %640 = vmatpush2.bf16.msra.mxu0 0
    %641 = vmatprep.subr.bf16.mxu0 0
    %642 = vmatpush2.bf16.msra.mxu0 0
    %643 = vmatprep.subr.bf16.mxu0 0
    %644 = vmatpush2.bf16.msra.mxu0 0
    %645 = vmatprep.mubr.bf16.mxu0 0
    %646 = vmatmul.mubr.bf16.gmra.mxu0 %v590
    %v647 = vpop.f32.mrf.mxu0
    %v648 = vadd.f32 0.0, %v647
    %v649 = vpop.f32.mrf.mxu0
    %v650 = vpop.f32.mrf.mxu0
    %v651 = vadd.f32 0.0, %v650
    %v652 = vpop.f32.mrf.mxu0
    %653 = vmatprep.mubr.bf16.mxu0 0
    %654 = vmatmul.mubr.bf16.gmra.mxu0 %v593
    %v655 = vpop.f32.mrf.mxu0
    %v656 = vadd.f32 0.0, %v655
    %v657 = vpop.f32.mrf.mxu0
    %v658 = vpop.f32.mrf.mxu0
    %v659 = vadd.f32 0.0, %v658
    %v660 = vpop.f32.mrf.mxu0
    %661 = vmatprep.mubr.bf16.mxu0 0
    %662 = vmatmul.mubr.bf16.gmra.mxu0 %v596
    %v663 = vpop.f32.mrf.mxu0
    %v664 = vadd.f32 0.0, %v663
    %v665 = vpop.f32.mrf.mxu0
    %v666 = vpop.f32.mrf.mxu0
    %v667 = vadd.f32 0.0, %v666
    %v668 = vpop.f32.mrf.mxu0
    %669 = vmatprep.mubr.bf16.mxu0 0
    %670 = vmatmul.mubr.bf16.gmra.mxu0 %v599
    %v671 = vpop.f32.mrf.mxu0
    %v672 = vadd.f32 0.0, %v671
    %v673 = vpop.f32.mrf.mxu0
    %v674 = vpop.f32.mrf.mxu0
    %v675 = vadd.f32 0.0, %v674
    %v676 = vpop.f32.mrf.mxu0
    %677 = vmatprep.mubr.bf16.mxu0 0
    %678 = vmatmul.mubr.bf16.gmra.mxu0 %v602
    %v679 = vpop.f32.mrf.mxu0
    %v680 = vadd.f32 0.0, %v679
    %v681 = vpop.f32.mrf.mxu0
    %v682 = vpop.f32.mrf.mxu0
    %v683 = vadd.f32 0.0, %v682
    %v684 = vpop.f32.mrf.mxu0
    %685 = vmatprep.mubr.bf16.mxu0 0
    %686 = vmatmul.mubr.bf16.gmra.mxu0 %v605
    %v687 = vpop.f32.mrf.mxu0
    %v688 = vadd.f32 0.0, %v687
    %v689 = vpop.f32.mrf.mxu0
    %v690 = vpop.f32.mrf.mxu0
    %v691 = vadd.f32 0.0, %v690
    %v692 = vpop.f32.mrf.mxu0
    %693 = vmatprep.mubr.bf16.mxu0 0
    %694 = vmatmul.mubr.bf16.gmra.mxu0 %v608
    %v695 = vpop.f32.mrf.mxu0
    %v696 = vadd.f32 0.0, %v695
    %v697 = vpop.f32.mrf.mxu0
    %v698 = vpop.f32.mrf.mxu0
    %v699 = vadd.f32 0.0, %v698
    %v700 = vpop.f32.mrf.mxu0
    %701 = vmatprep.mubr.bf16.mxu0 0
    %702 = vmatmul.mubr.bf16.gmra.mxu0 %v611
    %v703 = vpop.f32.mrf.mxu0
    %v704 = vadd.f32 0.0, %v703
    %v705 = vpop.f32.mrf.mxu0
    %v706 = vpop.f32.mrf.mxu0
    %v707 = vadd.f32 0.0, %v706
    %v708 = vpop.f32.mrf.mxu0
    %709 = vdwg.mxu0
    %v712 = vunpack.c.l.b16 %v321
    %v713 = vunpack.c.l.b16 %v322
    %v714 = vpack.c.b16 %v713, %v712
    %v717 = vsel %vm588, %v323, 0
    %v720 = vsel %vm588, %v324, 0
    %v723 = vsel %vm588, %v325, 0
    %v726 = vsel %vm588, %v326, 0
    %v729 = vsel %vm588, %v327, 0
    %v732 = vsel %vm588, %v328, 0
    %v735 = vsel %vm588, %v329, 0
    %v738 = vsel %vm588, %v330, 0
    %740 = vmatprep.subr.bf16.mxu0 0
    %741 = vmatpush1.bf16.msra.mxu0 0
    %742 = vmatprep.subr.bf16.mxu0 0
    %743 = vmatpush1.bf16.msra.mxu0 0
    %744 = vmatprep.subr.bf16.mxu0 0
    %745 = vmatpush1.bf16.msra.mxu0 0
    %746 = vmatprep.subr.bf16.mxu0 0
    %747 = vmatpush1.bf16.msra.mxu0 0
    %748 = vmatprep.subr.bf16.mxu0 0
    %749 = vmatpush1.bf16.msra.mxu0 0
    %750 = vmatprep.subr.bf16.mxu0 0
    %751 = vmatpush1.bf16.msra.mxu0 0
    %752 = vmatprep.subr.bf16.mxu0 0
    %753 = vmatpush1.bf16.msra.mxu0 0
    %754 = vmatprep.subr.bf16.mxu0 0
    %755 = vmatpush1.bf16.msra.mxu0 %v714
    %756 = vmatprep.subr.bf16.mxu0 0
    %757 = vmatpush2.bf16.msra.mxu0 0
    %758 = vmatprep.subr.bf16.mxu0 0
    %759 = vmatpush2.bf16.msra.mxu0 0
    %760 = vmatprep.subr.bf16.mxu0 0
    %761 = vmatpush2.bf16.msra.mxu0 0
    %762 = vmatprep.subr.bf16.mxu0 0
    %763 = vmatpush2.bf16.msra.mxu0 0
    %764 = vmatprep.subr.bf16.mxu0 0
    %765 = vmatpush2.bf16.msra.mxu0 0
    %766 = vmatprep.subr.bf16.mxu0 0
    %767 = vmatpush2.bf16.msra.mxu0 0
    %768 = vmatprep.subr.bf16.mxu0 0
    %769 = vmatpush2.bf16.msra.mxu0 0
    %770 = vmatprep.subr.bf16.mxu0 0
    %771 = vmatpush2.bf16.msra.mxu0 0
    %772 = vmatprep.mubr.bf16.mxu0 0
    %773 = vmatmul.mubr.bf16.gmra.mxu0 %v717
    %v774 = vpop.f32.mrf.mxu0
    %v775 = vadd.f32 %v648, %v774
    %v776 = vpop.f32.mrf.mxu0
    %v777 = vpop.f32.mrf.mxu0
    %v778 = vadd.f32 %v651, %v777
    %v779 = vpop.f32.mrf.mxu0
    %780 = vmatprep.mubr.bf16.mxu0 0
    %781 = vmatmul.mubr.bf16.gmra.mxu0 %v720
    %v782 = vpop.f32.mrf.mxu0
    %v783 = vadd.f32 %v656, %v782
    %v784 = vpop.f32.mrf.mxu0
    %v785 = vpop.f32.mrf.mxu0
    %v786 = vadd.f32 %v659, %v785
    %v787 = vpop.f32.mrf.mxu0
    %788 = vmatprep.mubr.bf16.mxu0 0
    %789 = vmatmul.mubr.bf16.gmra.mxu0 %v723
    %v790 = vpop.f32.mrf.mxu0
    %v791 = vadd.f32 %v664, %v790
    %v792 = vpop.f32.mrf.mxu0
    %v793 = vpop.f32.mrf.mxu0
    %v794 = vadd.f32 %v667, %v793
    %v795 = vpop.f32.mrf.mxu0
    %796 = vmatprep.mubr.bf16.mxu0 0
    %797 = vmatmul.mubr.bf16.gmra.mxu0 %v726
    %v798 = vpop.f32.mrf.mxu0
    %v799 = vadd.f32 %v672, %v798
    %v800 = vpop.f32.mrf.mxu0
    %v801 = vpop.f32.mrf.mxu0
    %v802 = vadd.f32 %v675, %v801
    %v803 = vpop.f32.mrf.mxu0
    %804 = vmatprep.mubr.bf16.mxu0 0
    %805 = vmatmul.mubr.bf16.gmra.mxu0 %v729
    %v806 = vpop.f32.mrf.mxu0
    %v807 = vadd.f32 %v680, %v806
    %v808 = vpop.f32.mrf.mxu0
    %v809 = vpop.f32.mrf.mxu0
    %v810 = vadd.f32 %v683, %v809
    %v811 = vpop.f32.mrf.mxu0
    %812 = vmatprep.mubr.bf16.mxu0 0
    %813 = vmatmul.mubr.bf16.gmra.mxu0 %v732
    %v814 = vpop.f32.mrf.mxu0
    %v815 = vadd.f32 %v688, %v814
    %v816 = vpop.f32.mrf.mxu0
    %v817 = vpop.f32.mrf.mxu0
    %v818 = vadd.f32 %v691, %v817
    %v819 = vpop.f32.mrf.mxu0
    %820 = vmatprep.mubr.bf16.mxu0 0
    %821 = vmatmul.mubr.bf16.gmra.mxu0 %v735
    %v822 = vpop.f32.mrf.mxu0
    %v823 = vadd.f32 %v696, %v822
    %v824 = vpop.f32.mrf.mxu0
    %v825 = vpop.f32.mrf.mxu0
    %v826 = vadd.f32 %v699, %v825
    %v827 = vpop.f32.mrf.mxu0
    %828 = vmatprep.mubr.bf16.mxu0 0
    %829 = vmatmul.mubr.bf16.gmra.mxu0 %v738
    %v830 = vpop.f32.mrf.mxu0
    %v831 = vadd.f32 %v704, %v830
    %v832 = vpop.f32.mrf.mxu0
    %v833 = vpop.f32.mrf.mxu0
    %v834 = vadd.f32 %v707, %v833
    %v835 = vpop.f32.mrf.mxu0
    %836 = vdwg.mxu0
    %v837 = vld [vmem:[%s3] sm:$0xf]
    %v838 = vld [vmem:[%s3 + $0x4] sm:$0xf]
    %v839 = vld [vmem:[%s3 + $0x8] sm:$0xf]
    %v840 = vld [vmem:[%s3 + $0xc] sm:$0xf]
    %v841 = vld [vmem:[%s3 + $0x10] sm:$0xf]
    %v842 = vld [vmem:[%s3 + $0x14] sm:$0xf]
    %v843 = vld [vmem:[%s3 + $0x18] sm:$0xf]
    %v844 = vld [vmem:[%s3 + $0x1c] sm:$0xf]
    %v845 = vld [vmem:[%s3 + $0x20] sm:$0xf]
    %v846 = vld [vmem:[%s3 + $0x24] sm:$0xf]
    %847 = vset.pattern.permute.xlu0 2
    %848 = vperm.xlu0 %847, %v37
    %v849 = vpop.permute.xlu0 %848
    %850 = vset.pattern.permute.xlu0 2
    %851 = vperm.xlu0 %850, %v38
    %v852 = vpop.permute.xlu0 %851
    %853 = vset.pattern.permute.xlu0 2
    %854 = vperm.xlu0 %853, %v39
    %v855 = vpop.permute.xlu0 %854
    %856 = vset.pattern.permute.xlu0 2
    %857 = vperm.xlu0 %856, %v40
    %v858 = vpop.permute.xlu0 %857
    %859 = vset.pattern.permute.xlu0 2
    %860 = vperm.xlu0 %859, %v41
    %v861 = vpop.permute.xlu0 %860
    %862 = vset.pattern.permute.xlu0 2
    %863 = vperm.xlu0 %862, %v42
    %v864 = vpop.permute.xlu0 %863
    %865 = vset.pattern.permute.xlu0 2
    %866 = vperm.xlu0 %865, %v43
    %v867 = vpop.permute.xlu0 %866
    %868 = vset.pattern.permute.xlu0 2
    %869 = vperm.xlu0 %868, %v44
    %v870 = vpop.permute.xlu0 %869
    %871 = vset.pattern.permute.xlu0 2
    %872 = vperm.xlu0 %871, %v45
    %v873 = vpop.permute.xlu0 %872
    %874 = vset.pattern.permute.xlu0 2
    %875 = vperm.xlu0 %874, %v46
    %v876 = vpop.permute.xlu0 %875
    %877 = vset.pattern.permute.xlu0 2
    %878 = vperm.xlu0 %877, %v47
    %v879 = vpop.permute.xlu0 %878
    %880 = vset.pattern.permute.xlu0 2
    %881 = vperm.xlu0 %880, %v48
    %v882 = vpop.permute.xlu0 %881
    %883 = vset.pattern.permute.xlu0 2
    %884 = vperm.xlu0 %883, %v49
    %v885 = vpop.permute.xlu0 %884
    %886 = vset.pattern.permute.xlu0 2
    %887 = vperm.xlu0 %886, %v50
    %v888 = vpop.permute.xlu0 %887
    %889 = vset.pattern.permute.xlu0 2
    %890 = vperm.xlu0 %889, %v51
    %v891 = vpop.permute.xlu0 %890
    %892 = vset.pattern.permute.xlu0 2
    %893 = vperm.xlu0 %892, %v52
    %v894 = vpop.permute.xlu0 %893
    %vm895 = vcmp.eq.s32.totalorder %v849, %v67
    %vm896 = vcmp.eq.s32.totalorder %v852, %v67
    %vm897 = vcmp.eq.s32.totalorder %v855, %v67
    %vm898 = vcmp.eq.s32.totalorder %v858, %v67
    %vm899 = vcmp.eq.s32.totalorder %v861, %v67
    %vm900 = vcmp.eq.s32.totalorder %v864, %v67
    %vm901 = vcmp.eq.s32.totalorder %v867, %v67
    %vm902 = vcmp.eq.s32.totalorder %v870, %v67
    %vm903 = vcmp.eq.s32.totalorder %v873, %v67
    %vm904 = vcmp.eq.s32.totalorder %v876, %v67
    %vm905 = vcmp.eq.s32.totalorder %v879, %v67
    %vm906 = vcmp.eq.s32.totalorder %v882, %v67
    %vm907 = vcmp.eq.s32.totalorder %v885, %v67
    %vm908 = vcmp.eq.s32.totalorder %v888, %v67
    %vm909 = vcmp.eq.s32.totalorder %v891, %v67
    %vm910 = vcmp.eq.s32.totalorder %v894, %v67
    %v911 = vsel %vm895, 1.0, 0.0
    %v912 = vsel %vm896, 1.0, 0.0
    %v913 = vsel %vm897, 1.0, 0.0
    %v914 = vsel %vm898, 1.0, 0.0
    %v915 = vsel %vm899, 1.0, 0.0
    %v916 = vsel %vm900, 1.0, 0.0
    %v917 = vsel %vm901, 1.0, 0.0
    %v918 = vsel %vm902, 1.0, 0.0
    %v919 = vsel %vm903, 1.0, 0.0
    %v920 = vsel %vm904, 1.0, 0.0
    %v921 = vsel %vm905, 1.0, 0.0
    %v922 = vsel %vm906, 1.0, 0.0
    %v923 = vsel %vm907, 1.0, 0.0
    %v924 = vsel %vm908, 1.0, 0.0
    %v925 = vsel %vm909, 1.0, 0.0
    %v926 = vsel %vm910, 1.0, 0.0
    %v927 = vpack.c.bf16 %v912, %v911
    %v928 = vpack.c.bf16 %v914, %v913
    %v929 = vpack.c.bf16 %v916, %v915
    %v930 = vpack.c.bf16 %v918, %v917
    %v931 = vpack.c.bf16 %v920, %v919
    %v932 = vpack.c.bf16 %v922, %v921
    %v933 = vpack.c.bf16 %v924, %v923
    %v934 = vpack.c.bf16 %v926, %v925
    %v945 = vunpack.c.l.b16 %v837
    %v946 = vunpack.c.l.b16 %v838
    %v947 = vunpack.c.l.b16 %v839
    %v948 = vunpack.c.l.b16 %v840
    %v949 = vunpack.c.l.b16 %v841
    %v950 = vunpack.c.l.b16 %v842
    %v951 = vunpack.c.l.b16 %v843
    %v952 = vunpack.c.l.b16 %v844
    %v953 = vunpack.c.l.b16 %v845
    %v954 = vunpack.c.l.b16 %v846
    %v955 = vpack.c.b16 %v946, %v945
    %v956 = vpack.c.b16 %v948, %v947
    %v957 = vpack.c.b16 %v950, %v949
    %v958 = vpack.c.b16 %v952, %v951
    %v959 = vpack.c.b16 %v954, %v953
    %vm965 = vcmask 654336
    %v967 = vsel %vm965, %v927, 0
    %v970 = vsel %vm965, %v928, 0
    %v973 = vsel %vm965, %v929, 0
    %v976 = vsel %vm965, %v930, 0
    %v979 = vsel %vm965, %v931, 0
    %v982 = vsel %vm965, %v932, 0
    %v985 = vsel %vm965, %v933, 0
    %v988 = vsel %vm965, %v934, 0
    %990 = vmatprep.subr.bf16.mxu0 0
    %991 = vmatpush1.bf16.msra.mxu0 0
    %992 = vmatprep.subr.bf16.mxu0 0
    %993 = vmatpush1.bf16.msra.mxu0 0
    %994 = vmatprep.subr.bf16.mxu0 0
    %995 = vmatpush1.bf16.msra.mxu0 0
    %996 = vmatprep.subr.bf16.mxu0 0
    %997 = vmatpush1.bf16.msra.mxu0 %v959
    %998 = vmatprep.subr.bf16.mxu0 0
    %999 = vmatpush1.bf16.msra.mxu0 %v958
    %1000 = vmatprep.subr.bf16.mxu0 0
    %1001 = vmatpush1.bf16.msra.mxu0 %v957
    %1002 = vmatprep.subr.bf16.mxu0 0
    %1003 = vmatpush1.bf16.msra.mxu0 %v956
    %1004 = vmatprep.subr.bf16.mxu0 0
    %1005 = vmatpush1.bf16.msra.mxu0 %v955
    %1006 = vmatprep.subr.bf16.mxu0 0
    %1007 = vmatpush2.bf16.msra.mxu0 0
    %1008 = vmatprep.subr.bf16.mxu0 0
    %1009 = vmatpush2.bf16.msra.mxu0 0
    %1010 = vmatprep.subr.bf16.mxu0 0
    %1011 = vmatpush2.bf16.msra.mxu0 0
    %1012 = vmatprep.subr.bf16.mxu0 0
    %1013 = vmatpush2.bf16.msra.mxu0 0
    %1014 = vmatprep.subr.bf16.mxu0 0
    %1015 = vmatpush2.bf16.msra.mxu0 0
    %1016 = vmatprep.subr.bf16.mxu0 0
    %1017 = vmatpush2.bf16.msra.mxu0 0
    %1018 = vmatprep.subr.bf16.mxu0 0
    %1019 = vmatpush2.bf16.msra.mxu0 0
    %1020 = vmatprep.subr.bf16.mxu0 0
    %1021 = vmatpush2.bf16.msra.mxu0 0
    %1022 = vmatprep.mubr.bf16.mxu0 0
    %1023 = vmatmul.mubr.bf16.gmra.mxu0 %v967
    %v1024 = vpop.f32.mrf.mxu0
    %v1025 = vadd.f32 0.0, %v1024
    %v1026 = vpop.f32.mrf.mxu0
    %v1027 = vpop.f32.mrf.mxu0
    %v1028 = vadd.f32 0.0, %v1027
    %v1029 = vpop.f32.mrf.mxu0
    %1030 = vmatprep.mubr.bf16.mxu0 0
    %1031 = vmatmul.mubr.bf16.gmra.mxu0 %v970
    %v1032 = vpop.f32.mrf.mxu0
    %v1033 = vadd.f32 0.0, %v1032
    %v1034 = vpop.f32.mrf.mxu0
    %v1035 = vpop.f32.mrf.mxu0
    %v1036 = vadd.f32 0.0, %v1035
    %v1037 = vpop.f32.mrf.mxu0
    %1038 = vmatprep.mubr.bf16.mxu0 0
    %1039 = vmatmul.mubr.bf16.gmra.mxu0 %v973
    %v1040 = vpop.f32.mrf.mxu0
    %v1041 = vadd.f32 0.0, %v1040
    %v1042 = vpop.f32.mrf.mxu0
    %v1043 = vpop.f32.mrf.mxu0
    %v1044 = vadd.f32 0.0, %v1043
    %v1045 = vpop.f32.mrf.mxu0
    %1046 = vmatprep.mubr.bf16.mxu0 0
    %1047 = vmatmul.mubr.bf16.gmra.mxu0 %v976
    %v1048 = vpop.f32.mrf.mxu0
    %v1049 = vadd.f32 0.0, %v1048
    %v1050 = vpop.f32.mrf.mxu0
    %v1051 = vpop.f32.mrf.mxu0
    %v1052 = vadd.f32 0.0, %v1051
    %v1053 = vpop.f32.mrf.mxu0
    %1054 = vmatprep.mubr.bf16.mxu0 0
    %1055 = vmatmul.mubr.bf16.gmra.mxu0 %v979
    %v1056 = vpop.f32.mrf.mxu0
    %v1057 = vadd.f32 0.0, %v1056
    %v1058 = vpop.f32.mrf.mxu0
    %v1059 = vpop.f32.mrf.mxu0
    %v1060 = vadd.f32 0.0, %v1059
    %v1061 = vpop.f32.mrf.mxu0
    %1062 = vmatprep.mubr.bf16.mxu0 0
    %1063 = vmatmul.mubr.bf16.gmra.mxu0 %v982
    %v1064 = vpop.f32.mrf.mxu0
    %v1065 = vadd.f32 0.0, %v1064
    %v1066 = vpop.f32.mrf.mxu0
    %v1067 = vpop.f32.mrf.mxu0
    %v1068 = vadd.f32 0.0, %v1067
    %v1069 = vpop.f32.mrf.mxu0
    %1070 = vmatprep.mubr.bf16.mxu0 0
    %1071 = vmatmul.mubr.bf16.gmra.mxu0 %v985
    %v1072 = vpop.f32.mrf.mxu0
    %v1073 = vadd.f32 0.0, %v1072
    %v1074 = vpop.f32.mrf.mxu0
    %v1075 = vpop.f32.mrf.mxu0
    %v1076 = vadd.f32 0.0, %v1075
    %v1077 = vpop.f32.mrf.mxu0
    %1078 = vmatprep.mubr.bf16.mxu0 0
    %1079 = vmatmul.mubr.bf16.gmra.mxu0 %v988
    %v1080 = vpop.f32.mrf.mxu0
    %v1081 = vadd.f32 0.0, %v1080
    %v1082 = vpop.f32.mrf.mxu0
    %v1083 = vpop.f32.mrf.mxu0
    %v1084 = vadd.f32 0.0, %v1083
    %v1085 = vpop.f32.mrf.mxu0
    %1086 = vdwg.mxu0
    %v1087 = vld [vmem:[%s4 + $0x10] sm:$0xf]
    %v1088 = vld [vmem:[%s4 + $0x14] sm:$0xf]
    %v1089 = vpack.c.bf16 %v1028, %v1025
    %v1090 = vpack.c.bf16 %v1036, %v1033
    %v1091 = vpack.c.bf16 %v1044, %v1041
    %v1092 = vpack.c.bf16 %v1052, %v1049
    %v1093 = vpack.c.bf16 %v1060, %v1057
    %v1094 = vpack.c.bf16 %v1068, %v1065
    %v1095 = vpack.c.bf16 %v1076, %v1073
    %v1096 = vpack.c.bf16 %v1084, %v1081
    %v1099 = vunpack.c.l.b16 %v1087
    %v1100 = vunpack.c.l.b16 %v1088
    %v1101 = vpack.c.b16 %v1100, %v1099
    %v1104 = vsel %vm588, %v1089, 0
    %v1107 = vsel %vm588, %v1090, 0
    %v1110 = vsel %vm588, %v1091, 0
    %v1113 = vsel %vm588, %v1092, 0
    %v1116 = vsel %vm588, %v1093, 0
    %v1119 = vsel %vm588, %v1094, 0
    %v1122 = vsel %vm588, %v1095, 0
    %v1125 = vsel %vm588, %v1096, 0
    %1127 = vmatprep.subr.bf16.mxu0 0
    %1128 = vmatpush1.bf16.msra.mxu0 0
    %1129 = vmatprep.subr.bf16.mxu0 0
    %1130 = vmatpush1.bf16.msra.mxu0 0
    %1131 = vmatprep.subr.bf16.mxu0 0
    %1132 = vmatpush1.bf16.msra.mxu0 0
    %1133 = vmatprep.subr.bf16.mxu0 0
    %1134 = vmatpush1.bf16.msra.mxu0 0
    %1135 = vmatprep.subr.bf16.mxu0 0
    %1136 = vmatpush1.bf16.msra.mxu0 0
    %1137 = vmatprep.subr.bf16.mxu0 0
    %1138 = vmatpush1.bf16.msra.mxu0 0
    %1139 = vmatprep.subr.bf16.mxu0 0
    %1140 = vmatpush1.bf16.msra.mxu0 0
    %1141 = vmatprep.subr.bf16.mxu0 0
    %1142 = vmatpush1.bf16.msra.mxu0 %v1101
    %1143 = vmatprep.subr.bf16.mxu0 0
    %1144 = vmatpush2.bf16.msra.mxu0 0
    %1145 = vmatprep.subr.bf16.mxu0 0
    %1146 = vmatpush2.bf16.msra.mxu0 0
    %1147 = vmatprep.subr.bf16.mxu0 0
    %1148 = vmatpush2.bf16.msra.mxu0 0
    %1149 = vmatprep.subr.bf16.mxu0 0
    %1150 = vmatpush2.bf16.msra.mxu0 0
    %1151 = vmatprep.subr.bf16.mxu0 0
    %1152 = vmatpush2.bf16.msra.mxu0 0
    %1153 = vmatprep.subr.bf16.mxu0 0
    %1154 = vmatpush2.bf16.msra.mxu0 0
    %1155 = vmatprep.subr.bf16.mxu0 0
    %1156 = vmatpush2.bf16.msra.mxu0 0
    %1157 = vmatprep.subr.bf16.mxu0 0
    %1158 = vmatpush2.bf16.msra.mxu0 0
    %1159 = vmatprep.mubr.bf16.mxu0 0
    %1160 = vmatmul.mubr.bf16.gmra.mxu0 %v1104
    %v1161 = vpop.f32.mrf.mxu0
    %v1162 = vadd.f32 0.0, %v1161
    %v1163 = vpop.f32.mrf.mxu0
    %v1164 = vpop.f32.mrf.mxu0
    %v1165 = vadd.f32 0.0, %v1164
    %v1166 = vpop.f32.mrf.mxu0
    %1167 = vmatprep.mubr.bf16.mxu0 0
    %1168 = vmatmul.mubr.bf16.gmra.mxu0 %v1107
    %v1169 = vpop.f32.mrf.mxu0
    %v1170 = vadd.f32 0.0, %v1169
    %v1171 = vpop.f32.mrf.mxu0
    %v1172 = vpop.f32.mrf.mxu0
    %v1173 = vadd.f32 0.0, %v1172
    %v1174 = vpop.f32.mrf.mxu0
    %1175 = vmatprep.mubr.bf16.mxu0 0
    %1176 = vmatmul.mubr.bf16.gmra.mxu0 %v1110
    %v1177 = vpop.f32.mrf.mxu0
    %v1178 = vadd.f32 0.0, %v1177
    %v1179 = vpop.f32.mrf.mxu0
    %v1180 = vpop.f32.mrf.mxu0
    %v1181 = vadd.f32 0.0, %v1180
    %v1182 = vpop.f32.mrf.mxu0
    %1183 = vmatprep.mubr.bf16.mxu0 0
    %1184 = vmatmul.mubr.bf16.gmra.mxu0 %v1113
    %v1185 = vpop.f32.mrf.mxu0
    %v1186 = vadd.f32 0.0, %v1185
    %v1187 = vpop.f32.mrf.mxu0
    %v1188 = vpop.f32.mrf.mxu0
    %v1189 = vadd.f32 0.0, %v1188
    %v1190 = vpop.f32.mrf.mxu0
    %1191 = vmatprep.mubr.bf16.mxu0 0
    %1192 = vmatmul.mubr.bf16.gmra.mxu0 %v1116
    %v1193 = vpop.f32.mrf.mxu0
    %v1194 = vadd.f32 0.0, %v1193
    %v1195 = vpop.f32.mrf.mxu0
    %v1196 = vpop.f32.mrf.mxu0
    %v1197 = vadd.f32 0.0, %v1196
    %v1198 = vpop.f32.mrf.mxu0
    %1199 = vmatprep.mubr.bf16.mxu0 0
    %1200 = vmatmul.mubr.bf16.gmra.mxu0 %v1119
    %v1201 = vpop.f32.mrf.mxu0
    %v1202 = vadd.f32 0.0, %v1201
    %v1203 = vpop.f32.mrf.mxu0
    %v1204 = vpop.f32.mrf.mxu0
    %v1205 = vadd.f32 0.0, %v1204
    %v1206 = vpop.f32.mrf.mxu0
    %1207 = vmatprep.mubr.bf16.mxu0 0
    %1208 = vmatmul.mubr.bf16.gmra.mxu0 %v1122
    %v1209 = vpop.f32.mrf.mxu0
    %v1210 = vadd.f32 0.0, %v1209
    %v1211 = vpop.f32.mrf.mxu0
    %v1212 = vpop.f32.mrf.mxu0
    %v1213 = vadd.f32 0.0, %v1212
    %v1214 = vpop.f32.mrf.mxu0
    %1215 = vmatprep.mubr.bf16.mxu0 0
    %1216 = vmatmul.mubr.bf16.gmra.mxu0 %v1125
    %v1217 = vpop.f32.mrf.mxu0
    %v1218 = vadd.f32 0.0, %v1217
    %v1219 = vpop.f32.mrf.mxu0
    %v1220 = vpop.f32.mrf.mxu0
    %v1221 = vadd.f32 0.0, %v1220
    %v1222 = vpop.f32.mrf.mxu0
    %1223 = vdwg.mxu0
    %v1224 = vadd.f32 %v775, %v1162
    %v1225 = vadd.f32 %v778, %v1165
    %v1226 = vadd.f32 %v783, %v1170
    %v1227 = vadd.f32 %v786, %v1173
    %v1228 = vadd.f32 %v791, %v1178
    %v1229 = vadd.f32 %v794, %v1181
    %v1230 = vadd.f32 %v799, %v1186
    %v1231 = vadd.f32 %v802, %v1189
    %v1232 = vadd.f32 %v807, %v1194
    %v1233 = vadd.f32 %v810, %v1197
    %v1234 = vadd.f32 %v815, %v1202
    %v1235 = vadd.f32 %v818, %v1205
    %v1236 = vadd.f32 %v823, %v1210
    %v1237 = vadd.f32 %v826, %v1213
    %v1238 = vadd.f32 %v831, %v1218
    %v1239 = vadd.f32 %v834, %v1221
    %v1240 = vld [vmem:[%s5] sm:$0x1]
    %v1242 = vlaneseq
    %v1243 = vshrl.u32 %v1242, 7
    %v1244 = vsub.s32 0, %v1243
    %v1245 = vrot.slane %v1240, %v1244
    %v1247 = vadd.f32 %v1224, %v1245
    %v1248 = vadd.f32 %v1225, %v1245
    %v1249 = vadd.f32 %v1226, %v1245
    %v1250 = vadd.f32 %v1227, %v1245
    %v1251 = vadd.f32 %v1228, %v1245
    %v1252 = vadd.f32 %v1229, %v1245
    %v1253 = vadd.f32 %v1230, %v1245
    %v1254 = vadd.f32 %v1231, %v1245
    %v1255 = vadd.f32 %v1232, %v1245
    %v1256 = vadd.f32 %v1233, %v1245
    %v1257 = vadd.f32 %v1234, %v1245
    %v1258 = vadd.f32 %v1235, %v1245
    %v1259 = vadd.f32 %v1236, %v1245
    %v1260 = vadd.f32 %v1237, %v1245
    %v1261 = vadd.f32 %v1238, %v1245
    %v1262 = vadd.f32 %v1239, %v1245
    %v1263 = vmax.f32 %v1247, 0.0
    %v1264 = vmax.f32 %v1248, 0.0
    %v1265 = vmax.f32 %v1249, 0.0
    %v1266 = vmax.f32 %v1250, 0.0
    %v1267 = vmax.f32 %v1251, 0.0
    %v1268 = vmax.f32 %v1252, 0.0
    %v1269 = vmax.f32 %v1253, 0.0
    %v1270 = vmax.f32 %v1254, 0.0
    %v1271 = vmax.f32 %v1255, 0.0
    %v1272 = vmax.f32 %v1256, 0.0
    %v1273 = vmax.f32 %v1257, 0.0
    %v1274 = vmax.f32 %v1258, 0.0
    %v1275 = vmax.f32 %v1259, 0.0
    %v1276 = vmax.f32 %v1260, 0.0
    %v1277 = vmax.f32 %v1261, 0.0
    %v1278 = vmax.f32 %v1262, 0.0
    %v1279 = vpack.c.bf16 %v1264, %v1263
    %v1280 = vpack.c.bf16 %v1266, %v1265
    %v1281 = vpack.c.bf16 %v1268, %v1267
    %v1282 = vpack.c.bf16 %v1270, %v1269
    %v1283 = vpack.c.bf16 %v1272, %v1271
    %v1284 = vpack.c.bf16 %v1274, %v1273
    %v1285 = vpack.c.bf16 %v1276, %v1275
    %v1286 = vpack.c.bf16 %v1278, %v1277
    %v1287 = vld [vmem:[%s6] sm:$0xf]
    %v1288 = vld [vmem:[%s6 + $0x4] sm:$0xf]
    %v1289 = vld [vmem:[%s6 + $0x8] sm:$0xf]
    %v1290 = vld [vmem:[%s6 + $0xc] sm:$0xf]
    %v1291 = vld [vmem:[%s6 + $0x10] sm:$0xf]
    %v1292 = vld [vmem:[%s6 + $0x14] sm:$0xf]
    %v1293 = vld [vmem:[%s6 + $0x18] sm:$0xf]
    %v1294 = vld [vmem:[%s6 + $0x1c] sm:$0xf]
    %v1295 = vld [vmem:[%s6 + $0x20] sm:$0xf]
    %v1296 = vld [vmem:[%s6 + $0x24] sm:$0xf]
    %v1297 = vld [vmem:[%s6 + $0x28] sm:$0xf]
    %v1298 = vld [vmem:[%s6 + $0x2c] sm:$0xf]
    %v1299 = vld [vmem:[%s6 + $0x30] sm:$0xf]
    %v1300 = vld [vmem:[%s6 + $0x34] sm:$0xf]
    %v1301 = vld [vmem:[%s6 + $0x38] sm:$0xf]
    %v1302 = vld [vmem:[%s6 + $0x3c] sm:$0xf]
    %v1303 = vld [vmem:[%s7] sm:$0x1]
    %v1305 = vlaneseq
    %v1306 = vshrl.u32 %v1305, 7
    %v1307 = vsub.s32 0, %v1306
    %v1308 = vrot.slane %v1303, %v1307
    %v1326 = vunpack.c.l.b16 %v1287
    %v1327 = vunpack.c.l.b16 %v1288
    %v1328 = vunpack.c.l.b16 %v1289
    %v1329 = vunpack.c.l.b16 %v1290
    %v1330 = vunpack.c.l.b16 %v1291
    %v1331 = vunpack.c.l.b16 %v1292
    %v1332 = vunpack.c.l.b16 %v1293
    %v1333 = vunpack.c.l.b16 %v1294
    %v1334 = vunpack.c.l.b16 %v1295
    %v1335 = vunpack.c.l.b16 %v1296
    %v1336 = vunpack.c.l.b16 %v1297
    %v1337 = vunpack.c.l.b16 %v1298
    %v1338 = vunpack.c.l.b16 %v1299
    %v1339 = vunpack.c.l.b16 %v1300
    %v1340 = vunpack.c.l.b16 %v1301
    %v1341 = vunpack.c.l.b16 %v1302
    %v1342 = vpack.c.b16 %v1327, %v1326
    %v1343 = vpack.c.b16 %v1329, %v1328
    %v1344 = vpack.c.b16 %v1331, %v1330
    %v1345 = vpack.c.b16 %v1333, %v1332
    %v1346 = vpack.c.b16 %v1335, %v1334
    %v1347 = vpack.c.b16 %v1337, %v1336
    %v1348 = vpack.c.b16 %v1339, %v1338
    %v1349 = vpack.c.b16 %v1341, %v1340
    %1358 = vmatprep.subr.bf16.mxu0 0
    %1359 = vmatpush1.bf16.msra.mxu0 %v1349
    %1360 = vmatprep.subr.bf16.mxu0 0
    %1361 = vmatpush1.bf16.msra.mxu0 %v1348
    %1362 = vmatprep.subr.bf16.mxu0 0
    %1363 = vmatpush1.bf16.msra.mxu0 %v1347
    %1364 = vmatprep.subr.bf16.mxu0 0
    %1365 = vmatpush1.bf16.msra.mxu0 %v1346
    %1366 = vmatprep.subr.bf16.mxu0 0
    %1367 = vmatpush1.bf16.msra.mxu0 %v1345
    %1368 = vmatprep.subr.bf16.mxu0 0
    %1369 = vmatpush1.bf16.msra.mxu0 %v1344
    %1370 = vmatprep.subr.bf16.mxu0 0
    %1371 = vmatpush1.bf16.msra.mxu0 %v1343
    %1372 = vmatprep.subr.bf16.mxu0 0
    %1373 = vmatpush1.bf16.msra.mxu0 %v1342
    %1374 = vmatprep.subr.bf16.mxu0 0
    %1375 = vmatpush2.bf16.msra.mxu0 0
    %1376 = vmatprep.subr.bf16.mxu0 0
    %1377 = vmatpush2.bf16.msra.mxu0 0
    %1378 = vmatprep.subr.bf16.mxu0 0
    %1379 = vmatpush2.bf16.msra.mxu0 0
    %1380 = vmatprep.subr.bf16.mxu0 0
    %1381 = vmatpush2.bf16.msra.mxu0 0
    %1382 = vmatprep.subr.bf16.mxu0 0
    %1383 = vmatpush2.bf16.msra.mxu0 0
    %1384 = vmatprep.subr.bf16.mxu0 0
    %1385 = vmatpush2.bf16.msra.mxu0 0
    %1386 = vmatprep.subr.bf16.mxu0 0
    %1387 = vmatpush2.bf16.msra.mxu0 0
    %1388 = vmatprep.subr.bf16.mxu0 0
    %1389 = vmatpush2.bf16.msra.mxu0 0
    %1390 = vmatprep.mubr.bf16.mxu0 0
    %1391 = vmatmul.mubr.bf16.gmra.mxu0 %v1279
    %v1392 = vpop.f32.mrf.mxu0
    %v1393 = vadd.f32 %v1308, %v1392
    %v1394 = vpop.f32.mrf.mxu0
    %v1395 = vpop.f32.mrf.mxu0
    %v1396 = vadd.f32 %v1308, %v1395
    %v1397 = vpop.f32.mrf.mxu0
    %1398 = vmatprep.mubr.bf16.mxu0 0
    %1399 = vmatmul.mubr.bf16.gmra.mxu0 %v1280
    %v1400 = vpop.f32.mrf.mxu0
    %v1401 = vadd.f32 %v1308, %v1400
    %v1402 = vpop.f32.mrf.mxu0
    %v1403 = vpop.f32.mrf.mxu0
    %v1404 = vadd.f32 %v1308, %v1403
    %v1405 = vpop.f32.mrf.mxu0
    %1406 = vmatprep.mubr.bf16.mxu0 0
    %1407 = vmatmul.mubr.bf16.gmra.mxu0 %v1281
    %v1408 = vpop.f32.mrf.mxu0
    %v1409 = vadd.f32 %v1308, %v1408
    %v1410 = vpop.f32.mrf.mxu0
    %v1411 = vpop.f32.mrf.mxu0
    %v1412 = vadd.f32 %v1308, %v1411
    %v1413 = vpop.f32.mrf.mxu0
    %1414 = vmatprep.mubr.bf16.mxu0 0
    %1415 = vmatmul.mubr.bf16.gmra.mxu0 %v1282
    %v1416 = vpop.f32.mrf.mxu0
    %v1417 = vadd.f32 %v1308, %v1416
    %v1418 = vpop.f32.mrf.mxu0
    %v1419 = vpop.f32.mrf.mxu0
    %v1420 = vadd.f32 %v1308, %v1419
    %v1421 = vpop.f32.mrf.mxu0
    %1422 = vmatprep.mubr.bf16.mxu0 0
    %1423 = vmatmul.mubr.bf16.gmra.mxu0 %v1283
    %v1424 = vpop.f32.mrf.mxu0
    %v1425 = vadd.f32 %v1308, %v1424
    %v1426 = vpop.f32.mrf.mxu0
    %v1427 = vpop.f32.mrf.mxu0
    %v1428 = vadd.f32 %v1308, %v1427
    %v1429 = vpop.f32.mrf.mxu0
    %1430 = vmatprep.mubr.bf16.mxu0 0
    %1431 = vmatmul.mubr.bf16.gmra.mxu0 %v1284
    %v1432 = vpop.f32.mrf.mxu0
    %v1433 = vadd.f32 %v1308, %v1432
    %v1434 = vpop.f32.mrf.mxu0
    %v1435 = vpop.f32.mrf.mxu0
    %v1436 = vadd.f32 %v1308, %v1435
    %v1437 = vpop.f32.mrf.mxu0
    %1438 = vmatprep.mubr.bf16.mxu0 0
    %1439 = vmatmul.mubr.bf16.gmra.mxu0 %v1285
    %v1440 = vpop.f32.mrf.mxu0
    %v1441 = vadd.f32 %v1308, %v1440
    %v1442 = vpop.f32.mrf.mxu0
    %v1443 = vpop.f32.mrf.mxu0
    %v1444 = vadd.f32 %v1308, %v1443
    %v1445 = vpop.f32.mrf.mxu0
    %1446 = vmatprep.mubr.bf16.mxu0 0
    %1447 = vmatmul.mubr.bf16.gmra.mxu0 %v1286
    %v1448 = vpop.f32.mrf.mxu0
    %v1449 = vadd.f32 %v1308, %v1448
    %v1450 = vpop.f32.mrf.mxu0
    %v1451 = vpop.f32.mrf.mxu0
    %v1452 = vadd.f32 %v1308, %v1451
    %v1453 = vpop.f32.mrf.mxu0
    %1454 = vdwg.mxu0
    %v1455 = vmax.f32 %v1393, 0.0
    %v1456 = vmax.f32 %v1396, 0.0
    %v1457 = vmax.f32 %v1401, 0.0
    %v1458 = vmax.f32 %v1404, 0.0
    %v1459 = vmax.f32 %v1409, 0.0
    %v1460 = vmax.f32 %v1412, 0.0
    %v1461 = vmax.f32 %v1417, 0.0
    %v1462 = vmax.f32 %v1420, 0.0
    %v1463 = vmax.f32 %v1425, 0.0
    %v1464 = vmax.f32 %v1428, 0.0
    %v1465 = vmax.f32 %v1433, 0.0
    %v1466 = vmax.f32 %v1436, 0.0
    %v1467 = vmax.f32 %v1441, 0.0
    %v1468 = vmax.f32 %v1444, 0.0
    %v1469 = vmax.f32 %v1449, 0.0
    %v1470 = vmax.f32 %v1452, 0.0
    %v1471 = vpack.c.bf16 %v1456, %v1455
    %v1472 = vpack.c.bf16 %v1458, %v1457
    %v1473 = vpack.c.bf16 %v1460, %v1459
    %v1474 = vpack.c.bf16 %v1462, %v1461
    %v1475 = vpack.c.bf16 %v1464, %v1463
    %v1476 = vpack.c.bf16 %v1466, %v1465
    %v1477 = vpack.c.bf16 %v1468, %v1467
    %v1478 = vpack.c.bf16 %v1470, %v1469
    %v1479 = vld [vmem:[%s8] sm:$0xf]
    %v1480 = vld [vmem:[%s8 + $0x4] sm:$0xf]
    %v1481 = vld [vmem:[%s8 + $0x8] sm:$0xf]
    %v1482 = vld [vmem:[%s8 + $0xc] sm:$0xf]
    %v1483 = vld [vmem:[%s8 + $0x10] sm:$0xf]
    %v1484 = vld [vmem:[%s8 + $0x14] sm:$0xf]
    %v1485 = vld [vmem:[%s8 + $0x18] sm:$0xf]
    %v1486 = vld [vmem:[%s8 + $0x1c] sm:$0xf]
    %v1487 = vld [vmem:[%s8 + $0x20] sm:$0xf]
    %v1488 = vld [vmem:[%s8 + $0x24] sm:$0xf]
    %v1489 = vld [vmem:[%s8 + $0x28] sm:$0xf]
    %v1490 = vld [vmem:[%s8 + $0x2c] sm:$0xf]
    %v1491 = vld [vmem:[%s8 + $0x30] sm:$0xf]
    %v1492 = vld [vmem:[%s8 + $0x34] sm:$0xf]
    %v1493 = vld [vmem:[%s8 + $0x38] sm:$0xf]
    %v1494 = vld [vmem:[%s8 + $0x3c] sm:$0xf]
    %v1495 = vld [vmem:[%s9] sm:$0x1]
    %v1497 = vlaneseq
    %v1498 = vshrl.u32 %v1497, 7
    %v1499 = vsub.s32 0, %v1498
    %v1500 = vrot.slane %v1495, %v1499
    %v1518 = vunpack.c.l.b16 %v1479
    %v1519 = vunpack.c.l.b16 %v1480
    %v1520 = vunpack.c.l.b16 %v1481
    %v1521 = vunpack.c.l.b16 %v1482
    %v1522 = vunpack.c.l.b16 %v1483
    %v1523 = vunpack.c.l.b16 %v1484
    %v1524 = vunpack.c.l.b16 %v1485
    %v1525 = vunpack.c.l.b16 %v1486
    %v1526 = vunpack.c.l.b16 %v1487
    %v1527 = vunpack.c.l.b16 %v1488
    %v1528 = vunpack.c.l.b16 %v1489
    %v1529 = vunpack.c.l.b16 %v1490
    %v1530 = vunpack.c.l.b16 %v1491
    %v1531 = vunpack.c.l.b16 %v1492
    %v1532 = vunpack.c.l.b16 %v1493
    %v1533 = vunpack.c.l.b16 %v1494
    %v1534 = vpack.c.b16 %v1519, %v1518
    %v1535 = vpack.c.b16 %v1521, %v1520
    %v1536 = vpack.c.b16 %v1523, %v1522
    %v1537 = vpack.c.b16 %v1525, %v1524
    %v1538 = vpack.c.b16 %v1527, %v1526
    %v1539 = vpack.c.b16 %v1529, %v1528
    %v1540 = vpack.c.b16 %v1531, %v1530
    %v1541 = vpack.c.b16 %v1533, %v1532
    %1550 = vmatprep.subr.bf16.mxu0 0
    %1551 = vmatpush1.bf16.msra.mxu0 %v1541
    %1552 = vmatprep.subr.bf16.mxu0 0
    %1553 = vmatpush1.bf16.msra.mxu0 %v1540
    %1554 = vmatprep.subr.bf16.mxu0 0
    %1555 = vmatpush1.bf16.msra.mxu0 %v1539
    %1556 = vmatprep.subr.bf16.mxu0 0
    %1557 = vmatpush1.bf16.msra.mxu0 %v1538
    %1558 = vmatprep.subr.bf16.mxu0 0
    %1559 = vmatpush1.bf16.msra.mxu0 %v1537
    %1560 = vmatprep.subr.bf16.mxu0 0
    %1561 = vmatpush1.bf16.msra.mxu0 %v1536
    %1562 = vmatprep.subr.bf16.mxu0 0
    %1563 = vmatpush1.bf16.msra.mxu0 %v1535
    %1564 = vmatprep.subr.bf16.mxu0 0
    %1565 = vmatpush1.bf16.msra.mxu0 %v1534
    %1566 = vmatprep.subr.bf16.mxu0 0
    %1567 = vmatpush2.bf16.msra.mxu0 0
    %1568 = vmatprep.subr.bf16.mxu0 0
    %1569 = vmatpush2.bf16.msra.mxu0 0
    %1570 = vmatprep.subr.bf16.mxu0 0
    %1571 = vmatpush2.bf16.msra.mxu0 0
    %1572 = vmatprep.subr.bf16.mxu0 0
    %1573 = vmatpush2.bf16.msra.mxu0 0
    %1574 = vmatprep.subr.bf16.mxu0 0
    %1575 = vmatpush2.bf16.msra.mxu0 0
    %1576 = vmatprep.subr.bf16.mxu0 0
    %1577 = vmatpush2.bf16.msra.mxu0 0
    %1578 = vmatprep.subr.bf16.mxu0 0
    %1579 = vmatpush2.bf16.msra.mxu0 0
    %1580 = vmatprep.subr.bf16.mxu0 0
    %1581 = vmatpush2.bf16.msra.mxu0 0
    %1582 = vmatprep.mubr.bf16.mxu0 0
    %1583 = vmatmul.mubr.bf16.gmra.mxu0 %v1471
    %v1584 = vpop.f32.mrf.mxu0
    %v1585 = vadd.f32 %v1500, %v1584
    %v1586 = vpop.f32.mrf.mxu0
    %v1587 = vpop.f32.mrf.mxu0
    %v1588 = vadd.f32 %v1500, %v1587
    %v1589 = vpop.f32.mrf.mxu0
    %1590 = vmatprep.mubr.bf16.mxu0 0
    %1591 = vmatmul.mubr.bf16.gmra.mxu0 %v1472
    %v1592 = vpop.f32.mrf.mxu0
    %v1593 = vadd.f32 %v1500, %v1592
    %v1594 = vpop.f32.mrf.mxu0
    %v1595 = vpop.f32.mrf.mxu0
    %v1596 = vadd.f32 %v1500, %v1595
    %v1597 = vpop.f32.mrf.mxu0
    %1598 = vmatprep.mubr.bf16.mxu0 0
    %1599 = vmatmul.mubr.bf16.gmra.mxu0 %v1473
    %v1600 = vpop.f32.mrf.mxu0
    %v1601 = vadd.f32 %v1500, %v1600
    %v1602 = vpop.f32.mrf.mxu0
    %v1603 = vpop.f32.mrf.mxu0
    %v1604 = vadd.f32 %v1500, %v1603
    %v1605 = vpop.f32.mrf.mxu0
    %1606 = vmatprep.mubr.bf16.mxu0 0
    %1607 = vmatmul.mubr.bf16.gmra.mxu0 %v1474
    %v1608 = vpop.f32.mrf.mxu0
    %v1609 = vadd.f32 %v1500, %v1608
    %v1610 = vpop.f32.mrf.mxu0
    %v1611 = vpop.f32.mrf.mxu0
    %v1612 = vadd.f32 %v1500, %v1611
    %v1613 = vpop.f32.mrf.mxu0
    %1614 = vmatprep.mubr.bf16.mxu0 0
    %1615 = vmatmul.mubr.bf16.gmra.mxu0 %v1475
    %v1616 = vpop.f32.mrf.mxu0
    %v1617 = vadd.f32 %v1500, %v1616
    %v1618 = vpop.f32.mrf.mxu0
    %v1619 = vpop.f32.mrf.mxu0
    %v1620 = vadd.f32 %v1500, %v1619
    %v1621 = vpop.f32.mrf.mxu0
    %1622 = vmatprep.mubr.bf16.mxu0 0
    %1623 = vmatmul.mubr.bf16.gmra.mxu0 %v1476
    %v1624 = vpop.f32.mrf.mxu0
    %v1625 = vadd.f32 %v1500, %v1624
    %v1626 = vpop.f32.mrf.mxu0
    %v1627 = vpop.f32.mrf.mxu0
    %v1628 = vadd.f32 %v1500, %v1627
    %v1629 = vpop.f32.mrf.mxu0
    %1630 = vmatprep.mubr.bf16.mxu0 0
    %1631 = vmatmul.mubr.bf16.gmra.mxu0 %v1477
    %v1632 = vpop.f32.mrf.mxu0
    %v1633 = vadd.f32 %v1500, %v1632
    %v1634 = vpop.f32.mrf.mxu0
    %v1635 = vpop.f32.mrf.mxu0
    %v1636 = vadd.f32 %v1500, %v1635
    %v1637 = vpop.f32.mrf.mxu0
    %1638 = vmatprep.mubr.bf16.mxu0 0
    %1639 = vmatmul.mubr.bf16.gmra.mxu0 %v1478
    %v1640 = vpop.f32.mrf.mxu0
    %v1641 = vadd.f32 %v1500, %v1640
    %v1642 = vpop.f32.mrf.mxu0
    %v1643 = vpop.f32.mrf.mxu0
    %v1644 = vadd.f32 %v1500, %v1643
    %v1645 = vpop.f32.mrf.mxu0
    %1646 = vdwg.mxu0
    %1647 = vst [vmem:[#allocation2] sm:$0xff] %v1585
    %1648 = vst [vmem:[#allocation2 + $0x8] sm:$0xff] %v1588
    %1649 = vst [vmem:[#allocation2 + $0x10] sm:$0xff] %v1593
    %1650 = vst [vmem:[#allocation2 + $0x18] sm:$0xff] %v1596
    %1651 = vst [vmem:[#allocation2 + $0x20] sm:$0xff] %v1601
    %1652 = vst [vmem:[#allocation2 + $0x28] sm:$0xff] %v1604
    %1653 = vst [vmem:[#allocation2 + $0x30] sm:$0xff] %v1609
    %1654 = vst [vmem:[#allocation2 + $0x38] sm:$0xff] %v1612
    %1655 = vst [vmem:[#allocation2 + $0x40] sm:$0xff] %v1617
    %1656 = vst [vmem:[#allocation2 + $0x48] sm:$0xff] %v1620
    %1657 = vst [vmem:[#allocation2 + $0x50] sm:$0xff] %v1625
    %1658 = vst [vmem:[#allocation2 + $0x58] sm:$0xff] %v1628
    %1659 = vst [vmem:[#allocation2 + $0x60] sm:$0xff] %v1633
    %1660 = vst [vmem:[#allocation2 + $0x68] sm:$0xff] %v1636
    %1661 = vst [vmem:[#allocation2 + $0x70] sm:$0xff] %v1641
    %1662 = vst [vmem:[#allocation2 + $0x78] sm:$0xff] %v1644
    // Predicated region
    $region42: #{tpu_custom_call.1} parent=1 // pred_check
      _
    $region43: #{tpu_custom_call.1} parent=1 // pred_check_branch
      %1664 = sbr.rel (0) target = $region45
    $region44: #{tpu_custom_call.1} parent=1 // pred_region
      %s1666 = ssub.s32 2048, 2048
      %1667 = vsyncadd [#allocation3], %s1666
      %s1668 = sshll.u32 [#allocation2], 4
      %s1669 = int_to_ptr.vmem [resolvable:$true] %s1668
      %1674 = dma.vmem_to_hbm [thread:$0]  %s1669, 2048, %s10, [#allocation3], 128, 128, 8
    $region45: #{tpu_custom_call.1} parent=1 // pred_fallthru
      _
    // Predicated region
    $region46: #{tpu_custom_call.1} parent=1 // pred_check
      _
    $region47: #{tpu_custom_call.1} parent=1 // pred_check_branch
      %1676 = sbr.rel (0) target = $region49
    $region48: #{tpu_custom_call.1} parent=1 // pred_region
      %1677 = dma.done [#allocation3], 2048
    $region49: #{tpu_custom_call.1} parent=1 // pred_fallthru
      _
    %1678 = vsyncpa [#allocation3], 1

</llo_original>
